<compile_context>
chip_gen: v5e
topology: v5e:2x2
jax: 0.10.0
libtpu: 0.0.40
codegen_flags: <defaults>
</compile_context>

<pallas_src>
import math

import jax
import jax.numpy as jnp
from jax.experimental import pallas as pl
from jax.experimental.pallas import tpu as pltpu

EMBED = 32                      # embed_size
HEADS = 2                       # heads
HEAD_DIM = EMBED // HEADS
FWD_EXP = 2                     # forward_expansion
HIDDEN = FWD_EXP * EMBED
EPS = 1e-5                      # nn.LayerNorm default eps
NEG_FILL = -1e20                # masked_fill value in the reference module
SCALE = 1.0 / math.sqrt(EMBED)  # softmax(energy / sqrt(embed_size))

SLAB_W = 128                    # lane-dense packed parameter slab width

# --------------------------- packed-parameter layout ---------------------------
_SLAB_LAYOUT = (
    ("wqkv1", EMBED, 3 * EMBED),   # fused self-attn [Q|K|V] (block-diag heads, Q pre-scaled)
    ("wfc1",  EMBED, EMBED),
    ("wq2",   EMBED, EMBED),
    ("wk2",   EMBED, EMBED),
    ("wv2",   EMBED, EMBED),
    ("wfc2",  EMBED, EMBED),
    ("wff1",  EMBED, HIDDEN),
    ("wff2",  HIDDEN, EMBED),
    ("g0", 1, EMBED), ("b0", 1, EMBED),
    ("g1", 1, EMBED), ("be1", 1, EMBED),
    ("g2", 1, EMBED), ("be2", 1, EMBED),
    ("bff1", 1, HIDDEN), ("bff2", 1, EMBED),
)


def _slab_offsets():
    offs, r = {}, 0
    for name, nr, nc in _SLAB_LAYOUT:
        offs[name] = (r, nr, nc)
        r += nr
    return offs, r


SLAB_OFFS, SLAB_ROWS = _slab_offsets()     # 296 rows (multiple of 8)


# ---------------------------------- the kernel ---------------------------------
def _make_kernel(L, Lk, causal_target, per_key_source, mm_dtype):
    E = EMBED
    NEG = float(NEG_FILL * SCALE)

    def kernel(*refs):
        out_ref = refs[-1]
        ws_ref = refs[-2]
        x_ref, v_ref, k_ref = refs[0], refs[1], refs[2]
        i = 3
        if causal_target:
            # causal mask generated in-kernel: a few VPU ops, no HBM traffic
            rowi = jax.lax.broadcasted_iota(jnp.int32, (L, L), 0)
            coli = jax.lax.broadcasted_iota(jnp.int32, (L, L), 1)
            tbias = jnp.where(coli <= rowi, 0.0, NEG).astype(jnp.float32)   # (L, L)
        else:
            tbias = refs[i][...]                                            # (TB, L, L)
            i += 1
        sbias = refs[i][...]           # (TB, 1, Lk) if per_key_source else (TB, L, Lk)

        TB = x_ref.shape[0] // L

        def W(name):                                   # weight block (mm_dtype)
            r0, nr, nc = SLAB_OFFS[name]
            return ws_ref[r0:r0 + nr, 0:nc]

        def V(name):                                   # vector row, f32 for VPU math
            r0, _, nc = SLAB_OFFS[name]
            return ws_ref[r0:r0 + 1, 0:nc].astype(jnp.float32)

        def mm(a, b):                                  # MXU matmul, f32 accumulate
            return jnp.dot(a.astype(mm_dtype), b, preferred_element_type=jnp.float32)

        def layernorm(z, g, b):
            mu = jnp.mean(z, axis=-1, keepdims=True)
            var = jnp.mean((z - mu) ** 2, axis=-1, keepdims=True)
            return (z - mu) * jax.lax.rsqrt(var + EPS) * g + b

        def mha(q, k, v, bias, wfc, Lq_, Lk_):
            # q: (TB*Lq_, E) f32, k/v: (TB*Lk_, E) f32, bias broadcastable to (TB,Lq_,Lk_)
            out = None
            for h in range(HEADS):     # tiny static unroll; softmax per head
                s = slice(h * HEAD_DIM, (h + 1) * HEAD_DIM)
                qh = q[:, s].reshape(TB, Lq_, HEAD_DIM).astype(mm_dtype)
                kh = k[:, s].reshape(TB, Lk_, HEAD_DIM).astype(mm_dtype)
                vh = v[:, s].reshape(TB, Lk_, HEAD_DIM).astype(mm_dtype)
                logits = jnp.einsum("bqd,bkd->bqk", qh, kh,
                                    preferred_element_type=jnp.float32) + bias
                m = jnp.max(logits, axis=-1, keepdims=True)
                p = jnp.exp(logits - m)
                inv = pl.reciprocal(jnp.sum(p, axis=-1, keepdims=True), approx=True)
                oh = jnp.einsum("bqk,bkd->bqd", (p * inv).astype(mm_dtype), vh,
                                preferred_element_type=jnp.float32)
                # head-concat folded into the output projection (partial fc sum)
                part = mm(oh.reshape(TB * Lq_, HEAD_DIM), wfc[s, :])
                out = part if out is None else out + part
            return out

        x = x_ref[...]                                   # (TB*L, E) mm_dtype

        # DecoderBlock: masked self-attention, fused Q|K|V projection -> 1 matmul
        qkv = mm(x, W("wqkv1"))                          # (TB*L, 3E) f32
        att1 = mha(qkv[:, 0:E], qkv[:, E:2 * E], qkv[:, 2 * E:3 * E],
                   tbias, W("wfc1"), L, L)
        query = layernorm(att1 + x.astype(jnp.float32), V("g0"), V("b0"))
        # TODO(synk): nn.Dropout has no eval-mode effect; treated as identity.

        # TransformerBlock: cross-attention(value, key, query)
        q2 = mm(query, W("wq2"))
        k2 = mm(k_ref[...], W("wk2"))
        v2 = mm(v_ref[...], W("wv2"))
        att2 = mha(q2, k2, v2, sbias, W("wfc2"), L, Lk)
        xq = layernorm(att2 + query, V("g1"), V("be1"))

        # feed-forward (Linear -> ReLU -> Linear) + residual + LayerNorm
        hid = jnp.maximum(mm(xq, W("wff1")) + V("bff1"), 0.0)
        fw = mm(hid, W("wff2")) + V("bff2")
        out_ref[...] = layernorm(fw + xq, V("g2"), V("be2")).astype(out_ref.dtype)

    return kernel


# ------------------------------ host-side packing ------------------------------
def _block_diag_heads(w, scale=1.0):
    # w: (HEAD_DIM, HEAD_DIM) in PyTorch (out, in) layout -> (E, E) block-diagonal,
    # pre-transposed so that x @ W applies w per head.
    bd = jnp.zeros((EMBED, EMBED), jnp.float32)
    for h in range(HEADS):
        s = slice(h * HEAD_DIM, (h + 1) * HEAD_DIM)
        bd = bd.at[s, s].set(jnp.asarray(w, jnp.float32).T * scale)
    return bd


def _pack_slab(p, mm_dtype):
    mats = {
        "wqkv1": jnp.concatenate(
            [_block_diag_heads(p["wq1"], SCALE),      # fold 1/sqrt(E) into Q
             _block_diag_heads(p["wk1"]),
             _block_diag_heads(p["wv1"])], axis=1),
        "wfc1": p["wfc1"].T,
        "wq2": _block_diag_heads(p["wq2"], SCALE),
        "wk2": _block_diag_heads(p["wk2"]),
        "wv2": _block_diag_heads(p["wv2"]),
        "wfc2": p["wfc2"].T,
        "wff1": p["wff1"].T,
        "wff2": p["wff2"].T,
        "g0": p["g0"], "b0": p["b0"], "g1": p["g1"], "be1": p["be1"],
        "g2": p["g2"], "be2": p["be2"], "bff1": p["bff1"], "bff2": p["bff2"],
    }
    slab = jnp.zeros((SLAB_ROWS, SLAB_W), jnp.float32)
    for name, (r0, nr, nc) in SLAB_OFFS.items():
        slab = slab.at[r0:r0 + nr, 0:nc].set(
            jnp.asarray(mats[name], jnp.float32).reshape(nr, nc))
    return slab.astype(mm_dtype)


def _pick_batch_tile(N, L, Lk, causal, per_key, itemsize,
                     target_rows=2048, vmem_budget=8 << 20):
    """Largest TB that divides N, satisfies sublane rules and a VMEM budget,
    preferring >=2 grid steps (dual-TC chips)."""
    sub = 8 if itemsize >= 4 else 16

    def divisible(tb):
        return N % tb == 0 and (tb == N or ((tb * L) % sub == 0 and (tb * Lk) % sub == 0))

    def step_bytes(tb):
        blk = itemsize * tb * (L + 2 * Lk) * EMBED + 4 * tb * L * EMBED   # x, k, v, out
        blk += 0 if causal else 4 * tb * L * L
        blk += 4 * tb * (Lk if per_key else L * Lk)
        tmp = 4 * tb * L * (2 * L + 2 * Lk + 6 * EMBED + 2 * HIDDEN)      # in-kernel temps
        return 2 * blk + tmp                                              # double-buffered

    cand = [tb for tb in range(1, N + 1) if divisible(tb)]
    good = [tb for tb in cand if tb * L <= target_rows and step_bytes(tb) <= vmem_budget]
    tb = max(good) if good else min(cand)
    if tb == N and N > 1:                       # leave >=2 grid steps when legal
        halves = [t for t in good if t <= N // 2]
        if halves:
            tb = max(halves)
    return tb


def _concrete_pred(fn):
    """Evaluate a host predicate on (possibly traced) masks; False => general path."""
    try:
        return bool(fn())
    except Exception:
        return False


# ----------------------------------- wrapper -----------------------------------
def decoder_block(x, value, key, source_mask, target_mask, params, *,
                  mm_dtype=jnp.float32):
    N, L, E = x.shape
    Lk = key.shape[1]
    assert E == EMBED
    assert value.shape == (N, Lk, EMBED)

    # head-broadcast masks (module passes (N, 1, Lq, Lk))
    tm = jnp.broadcast_to(target_mask, (N, target_mask.shape[1], L, L))[:, 0]
    sm = jnp.broadcast_to(source_mask, (N, source_mask.shape[1], L, Lk))[:, 0]

    causal = _concrete_pred(lambda: jnp.array_equal(
        tm != 0,
        jnp.broadcast_to(jnp.tril(jnp.ones((L, L), jnp.int32)) > 0, tm.shape)))
    per_key = _concrete_pred(lambda: jnp.array_equal(
        sm, jnp.broadcast_to(sm[:, :1, :], sm.shape)))

    itemsize = jnp.dtype(mm_dtype).itemsize
    TB = _pick_batch_tile(N, L, Lk, causal, per_key, itemsize)
    grid = (N // TB,)

    slab = _pack_slab(params, mm_dtype)
    x2 = x.reshape(N * L, E).astype(mm_dtype)
    v2 = value.reshape(N * Lk, E).astype(mm_dtype)
    k2 = key.reshape(N * Lk, E).astype(mm_dtype)

    NEG = jnp.float32(NEG_FILL * SCALE)
    args = [x2, v2, k2]
    in_specs = [pl.BlockSpec((TB * L, E), lambda n: (n, 0)),
                pl.BlockSpec((TB * Lk, E), lambda n: (n, 0)),
                pl.BlockSpec((TB * Lk, E), lambda n: (n, 0))]
    if not causal:                                        # explicit target bias (general)
        args.append(jnp.where(tm == 0, NEG, 0.0).astype(jnp.float32))          # (N,L,L)
        in_specs.append(pl.BlockSpec((TB, L, L), lambda n: (n, 0, 0)))
    if per_key:                                           # compressed per-key source bias
        args.append(jnp.where(sm[:, :1, :] == 0, NEG, 0.0).astype(jnp.float32))  # (N,1,Lk)
        in_specs.append(pl.BlockSpec((TB, 1, Lk), lambda n: (n, 0, 0)))
    else:                                                 # explicit source bias (general)
        args.append(jnp.where(sm == 0, NEG, 0.0).astype(jnp.float32))          # (N,L,Lk)
        in_specs.append(pl.BlockSpec((TB, L, Lk), lambda n: (n, 0, 0)))
    args.append(slab)
    in_specs.append(pl.BlockSpec(slab.shape, lambda n: (0, 0)))

    rows, rows_kv = N * L, N * Lk
    flops = int(2 * rows * E * (3 * E) + 2 * rows * E * E
                + 2 * (rows + 2 * rows_kv) * E * E + 2 * rows * E * E
                + 4 * rows * E * (L + Lk) + 4 * rows * E * HIDDEN)
    transc = int(rows * (HEADS * (L + Lk) + 2 * HEADS + 3))
    bytes_acc = int(sum(int(a.nbytes) for a in args) + rows * E * 4)

    kernel = _make_kernel(L, Lk, causal, per_key, mm_dtype)
    out2 = pl.pallas_call(
        kernel,
        out_shape=jax.ShapeDtypeStruct((N * L, E), jnp.float32),
        grid_spec=pltpu.PrefetchScalarGridSpec(
            num_scalar_prefetch=0,
            grid=grid,
            in_specs=in_specs,
            out_specs=pl.BlockSpec((TB * L, E), lambda n: (n, 0)),
        ),
        compiler_params=pltpu.CompilerParams(
            dimension_semantics=("parallel",),
            vmem_limit_bytes=32 * 1024 * 1024),
        cost_estimate=pl.CostEstimate(flops=flops, transcendentals=transc,
                                      bytes_accessed=bytes_acc),
    )(*args)

    return out2.reshape(N, L, E)


# ---------------------------- deterministic params -----------------------------
def init_params(rng):
    ks = jax.random.split(rng, 12)

    def lin(k, out_f, in_f):
        bound = 1.0 / math.sqrt(in_f)
        return jax.random.uniform(k, (out_f, in_f), jnp.float32, -bound, bound)

    def vec(k, n):
        bound = 1.0 / math.sqrt(n)
        return jax.random.uniform(k, (1, n), jnp.float32, -bound, bound)

    return {
        "wq1": lin(ks[0], HEAD_DIM, HEAD_DIM),
        "wk1": lin(ks[1], HEAD_DIM, HEAD_DIM),
        "wv1": lin(ks[2], HEAD_DIM, HEAD_DIM),
        "wfc1": lin(ks[3], EMBED, EMBED),
        "g0": jnp.ones((1, EMBED), jnp.float32),
        "b0": jnp.zeros((1, EMBED), jnp.float32),
        "wq2": lin(ks[4], HEAD_DIM, HEAD_DIM),
        "wk2": lin(ks[5], HEAD_DIM, HEAD_DIM),
        "wv2": lin(ks[6], HEAD_DIM, HEAD_DIM),
        "wfc2": lin(ks[7], EMBED, EMBED),
        "g1": jnp.ones((1, EMBED), jnp.float32),
        "be1": jnp.zeros((1, EMBED), jnp.float32),
        "g2": jnp.ones((1, EMBED), jnp.float32),
        "be2": jnp.zeros((1, EMBED), jnp.float32),
        "wff1": lin(ks[8], HIDDEN, EMBED),
        "bff1": vec(ks[9], HIDDEN),
        "wff2": lin(ks[10], EMBED, HIDDEN),
        "bff2": vec(ks[11], EMBED),
    }


# ------------------------------ plain-JAX reference ----------------------------
def reference(x, value, key, source_mask, target_mask, p):
    def attn(q, k, v, mask, wq, wk, wv, wfc):
        N, L, E = q.shape
        qh = q.reshape(N, L, HEADS, HEAD_DIM) @ wq.T
        kh = k.reshape(N, k.shape[1], HEADS, HEAD_DIM) @ wk.T
        vh = v.reshape(N, v.shape[1], HEADS, HEAD_DIM) @ wv.T
        energy = jnp.einsum("nqhd,nkhd->nhqk", qh, kh)
        energy = jnp.where(mask == 0, NEG_FILL, energy)
        a = jax.nn.softmax(energy / math.sqrt(EMBED), axis=3)
        o = jnp.einsum("nhql,nlhd->nqhd", a, vh).reshape(N, L, E)
        return o @ wfc.T

    def ln(z, g, b):
        mu = z.mean(-1, keepdims=True)
        var = ((z - mu) ** 2).mean(-1, keepdims=True)
        return (z - mu) / jnp.sqrt(var + EPS) * g + b

    att1 = attn(x, x, x, target_mask, p["wq1"], p["wk1"], p["wv1"], p["wfc1"])
    query = ln(att1 + x, p["g0"], p["b0"])
    att2 = attn(query, key, value, source_mask,
                p["wq2"], p["wk2"], p["wv2"], p["wfc2"])
    xq = ln(att2 + query, p["g1"], p["be1"])
    h = jax.nn.relu(xq @ p["wff1"].T + p["bff1"])
    fw = h @ p["wff2"].T + p["bff2"]
    return ln(fw + xq, p["g2"], p["be2"])


# ------------------------------------ main --------------------------------------
if __name__ == "__main__":
    N, L = 2, 8
    root = jax.random.PRNGKey(0)
    kx, kv, kk, kp, km = jax.random.split(root, 5)

    x = jax.random.normal(kx, (N, L, EMBED), jnp.float32)
    value = jax.random.normal(kv, (N, L, EMBED), jnp.float32)
    key = jax.random.normal(kk, (N, L, EMBED), jnp.float32)

    # causal target mask + per-key source padding mask (last key of batch 0 padded)
    target_mask = jnp.tile(jnp.tril(jnp.ones((L, L), jnp.int32))[None, None],
                           (N, 1, 1, 1))
    key_valid = jnp.ones((N, L), jnp.int32).at[0, L - 1].set(0)
    source_mask = jnp.broadcast_to(key_valid[:, None, None, :],
                                   (N, 1, L, L)).astype(jnp.int32)

    params = init_params(kp)
    ref = reference(x, value, key, source_mask, target_mask, params)

    # 1) fast path: causal mask generated in-kernel + per-key source bias (f32)
    out = jax.block_until_ready(
        decoder_block(x, value, key, source_mask, target_mask, params))
    assert out.shape == (N, L, EMBED)
    err = float(jnp.max(jnp.abs(out - ref)))
    assert jnp.allclose(out, ref, rtol=2e-3, atol=2e-3), f"fast path max err {err}"

    # 2) general fallback path: arbitrary (non-causal / q-dependent) masks (f32)
    tmask2 = (jax.random.bernoulli(km, 0.6, (N, 1, L, L))
              | jnp.eye(L, dtype=bool)[None, None]).astype(jnp.int32)
    smask2 = (jax.random.bernoulli(jax.random.fold_in(km, 1), 0.6, (N, 1, L, L))
              | jnp.eye(L, dtype=bool)[None, None]).astype(jnp.int32)
    ref2 = reference(x, value, key, smask2, tmask2, params)
    out2 = jax.block_until_ready(
        decoder_block(x, value, key, smask2, tmask2, params))
    err2 = float(jnp.max(jnp.abs(out2 - ref2)))
    assert jnp.allclose(out2, ref2, rtol=2e-3, atol=2e-3), f"general path max err {err2}"

    # 3) bf16 matmul-input path (native MXU width on v6e/v7x); looser tolerance
    out_bf = jax.block_until_ready(
        decoder_block(x, value, key, source_mask, target_mask, params,
                      mm_dtype=jnp.bfloat16))
    err3 = float(jnp.max(jnp.abs(out_bf - ref)))
    assert jnp.allclose(out_bf, ref, rtol=5e-2, atol=5e-2), f"bf16 path max err {err3}"

    print("KERNEL_OK")
</pallas_src>

<mosaic_0001>
module attributes {stable_mosaic.version = 11 : i64} {
  func.func @kernel(%arg0: i32, %arg1: memref<8x32xf32, #tpu.memory_space<vmem>>, %arg2: memref<8x32xf32, #tpu.memory_space<vmem>>, %arg3: memref<8x32xf32, #tpu.memory_space<vmem>>, %arg4: memref<1x1x8xf32, #tpu.memory_space<vmem>>, %arg5: memref<296x128xf32, #tpu.memory_space<vmem>>, %arg6: memref<8x32xf32, #tpu.memory_space<vmem>>) attributes {dimension_semantics = [#tpu.dimension_semantics<parallel>], iteration_bounds = array<i64: 2>, scalar_prefetch = 0 : i64, scratch_operands = 0 : i64, tpu.core_type = #tpu.core_type<tc>, window_params = [{transform_indices = @transform_0, window_bounds = array<i64: 8, 32>}, {transform_indices = @transform_1, window_bounds = array<i64: 8, 32>}, {transform_indices = @transform_2, window_bounds = array<i64: 8, 32>}, {transform_indices = @transform_3, window_bounds = array<i64: 1, 1, 8>}, {pipeline_mode = #tpu.pipeline_mode<synchronous>, transform_indices = @transform_4, window_bounds = array<i64: 296, 128>}, {transform_indices = @transform_5, window_bounds = array<i64: 8, 32>}]} {
    %0 = tpu.iota {dimensions = array<i32: 0>} : vector<8x8xi32>
    %1 = tpu.iota {dimensions = array<i32: 1>} : vector<8x8xi32>
    %2 = arith.cmpi sle, %1, %0 : vector<8x8xi32>
    %cst = arith.constant 0.000000e+00 : f32
    %cst_0 = arith.constant -1.76776698E+19 : f32
    %3 = vector.broadcast %cst : f32 to vector<8x8xf32>
    %4 = vector.broadcast %cst_0 : f32 to vector<8x8xf32>
    %5 = arith.select %2, %3, %4 : vector<8x8xi1>, vector<8x8xf32>
    %c0 = arith.constant 0 : index
    %c0_1 = arith.constant 0 : index
    %c0_2 = arith.constant 0 : index
    %6 = vector.load %arg4[%c0, %c0_1, %c0_2] : memref<1x1x8xf32, #tpu.memory_space<vmem>>, vector<1x1x8xf32>
    %c0_3 = arith.constant 0 : index
    %c0_4 = arith.constant 0 : index
    %7 = vector.load %arg1[%c0_3, %c0_4] : memref<8x32xf32, #tpu.memory_space<vmem>>, vector<8x32xf32>
    %c0_5 = arith.constant 0 : index
    %c0_6 = arith.constant 0 : index
    %8 = vector.load %arg5[%c0_5, %c0_6] : memref<296x128xf32, #tpu.memory_space<vmem>>, vector<32x96xf32>
    %cst_7 = arith.constant dense<0.000000e+00> : vector<8x96xf32>
    %9 = tpu.matmul %7, %8, %cst_7 {dimension_numbers = #tpu.dot_dimension_numbers<[1], [0], [0], [1], [0, 0, 1, 1], [], []>} : vector<8x32xf32>, vector<32x96xf32>, vector<8x96xf32> -> vector<8x96xf32>
    %10 = vector.extract_strided_slice %9 {offsets = [0, 0], sizes = [8, 32], strides = [1, 1]} : vector<8x96xf32> to vector<8x32xf32>
    %11 = vector.extract_strided_slice %9 {offsets = [0, 32], sizes = [8, 32], strides = [1, 1]} : vector<8x96xf32> to vector<8x32xf32>
    %12 = vector.extract_strided_slice %9 {offsets = [0, 64], sizes = [8, 32], strides = [1, 1]} : vector<8x96xf32> to vector<8x32xf32>
    %c32 = arith.constant 32 : index
    %c0_8 = arith.constant 0 : index
    %13 = vector.load %arg5[%c32, %c0_8] : memref<296x128xf32, #tpu.memory_space<vmem>>, vector<32x32xf32>
    %14 = vector.extract_strided_slice %10 {offsets = [0, 0], sizes = [8, 16], strides = [1, 1]} : vector<8x32xf32> to vector<8x16xf32>
    %15 = vector.shape_cast %14 : vector<8x16xf32> to vector<1x8x16xf32>
    %16 = vector.extract_strided_slice %11 {offsets = [0, 0], sizes = [8, 16], strides = [1, 1]} : vector<8x32xf32> to vector<8x16xf32>
    %17 = vector.shape_cast %16 : vector<8x16xf32> to vector<1x8x16xf32>
    %18 = vector.extract_strided_slice %12 {offsets = [0, 0], sizes = [8, 16], strides = [1, 1]} : vector<8x32xf32> to vector<8x16xf32>
    %19 = vector.shape_cast %18 : vector<8x16xf32> to vector<1x8x16xf32>
    "tpu.trace_start"() <{level = 10 : i32, message = "bqd,bkd->bqk"}> : () -> ()
    %cst_9 = arith.constant dense<0.000000e+00> : vector<1x8x8xf32>
    %20 = tpu.matmul %15, %17, %cst_9 {dimension_numbers = #tpu.dot_dimension_numbers<[2], [2], [1], [1], [0, 0, 0, 1, 1, 1], [0], [0]>} : vector<1x8x16xf32>, vector<1x8x16xf32>, vector<1x8x8xf32> -> vector<1x8x8xf32>
    "tpu.trace_stop"() : () -> ()
    %21 = vector.shape_cast %5 : vector<8x8xf32> to vector<1x8x8xf32>
    %22 = arith.addf %20, %21 : vector<1x8x8xf32>
    %cst_10 = arith.constant dense<0xFF800000> : vector<1x8xf32>
    %23 = vector.multi_reduction <maximumf>, %22, %cst_10 [2] : vector<1x8x8xf32> to vector<1x8xf32>
    %24 = vector.shape_cast %23 : vector<1x8xf32> to vector<1x8x1xf32>
    %25 = vector.broadcast %24 : vector<1x8x1xf32> to vector<1x8x8xf32>
    %26 = arith.subf %22, %25 : vector<1x8x8xf32>
    %27 = math.exp %26 : vector<1x8x8xf32>
    %cst_11 = arith.constant dense<0.000000e+00> : vector<1x8xf32>
    %28 = vector.multi_reduction <add>, %27, %cst_11 [2] : vector<1x8x8xf32> to vector<1x8xf32>
    %29 = vector.shape_cast %28 : vector<1x8xf32> to vector<1x8x1xf32>
    %30 = tpu.reciprocal %29 {approx = true} : vector<1x8x1xf32> -> vector<1x8x1xf32>
    %31 = vector.broadcast %30 : vector<1x8x1xf32> to vector<1x8x8xf32>
    %32 = arith.mulf %27, %31 : vector<1x8x8xf32>
    "tpu.trace_start"() <{level = 10 : i32, message = "bqk,bkd->bqd"}> : () -> ()
    %cst_12 = arith.constant dense<0.000000e+00> : vector<1x8x16xf32>
    %33 = tpu.matmul %32, %19, %cst_12 {dimension_numbers = #tpu.dot_dimension_numbers<[2], [1], [1], [2], [0, 0, 0, 1, 1, 2], [0], [0]>} : vector<1x8x8xf32>, vector<1x8x16xf32>, vector<1x8x16xf32> -> vector<1x8x16xf32>
    "tpu.trace_stop"() : () -> ()
    %34 = vector.shape_cast %33 : vector<1x8x16xf32> to vector<8x16xf32>
    %35 = vector.extract_strided_slice %13 {offsets = [0, 0], sizes = [16, 32], strides = [1, 1]} : vector<32x32xf32> to vector<16x32xf32>
    %cst_13 = arith.constant dense<0.000000e+00> : vector<8x32xf32>
    %36 = tpu.matmul %34, %35, %cst_13 {dimension_numbers = #tpu.dot_dimension_numbers<[1], [0], [0], [1], [0, 0, 1, 1], [], []>} : vector<8x16xf32>, vector<16x32xf32>, vector<8x32xf32> -> vector<8x32xf32>
    %37 = vector.extract_strided_slice %10 {offsets = [0, 16], sizes = [8, 16], strides = [1, 1]} : vector<8x32xf32> to vector<8x16xf32>
    %38 = vector.shape_cast %37 : vector<8x16xf32> to vector<1x8x16xf32>
    %39 = vector.extract_strided_slice %11 {offsets = [0, 16], sizes = [8, 16], strides = [1, 1]} : vector<8x32xf32> to vector<8x16xf32>
    %40 = vector.shape_cast %39 : vector<8x16xf32> to vector<1x8x16xf32>
    %41 = vector.extract_strided_slice %12 {offsets = [0, 16], sizes = [8, 16], strides = [1, 1]} : vector<8x32xf32> to vector<8x16xf32>
    %42 = vector.shape_cast %41 : vector<8x16xf32> to vector<1x8x16xf32>
    "tpu.trace_start"() <{level = 10 : i32, message = "bqd,bkd->bqk"}> : () -> ()
    %cst_14 = arith.constant dense<0.000000e+00> : vector<1x8x8xf32>
    %43 = tpu.matmul %38, %40, %cst_14 {dimension_numbers = #tpu.dot_dimension_numbers<[2], [2], [1], [1], [0, 0, 0, 1, 1, 1], [0], [0]>} : vector<1x8x16xf32>, vector<1x8x16xf32>, vector<1x8x8xf32> -> vector<1x8x8xf32>
    "tpu.trace_stop"() : () -> ()
    %44 = vector.shape_cast %5 : vector<8x8xf32> to vector<1x8x8xf32>
    %45 = arith.addf %43, %44 : vector<1x8x8xf32>
    %cst_15 = arith.constant dense<0xFF800000> : vector<1x8xf32>
    %46 = vector.multi_reduction <maximumf>, %45, %cst_15 [2] : vector<1x8x8xf32> to vector<1x8xf32>
    %47 = vector.shape_cast %46 : vector<1x8xf32> to vector<1x8x1xf32>
    %48 = vector.broadcast %47 : vector<1x8x1xf32> to vector<1x8x8xf32>
    %49 = arith.subf %45, %48 : vector<1x8x8xf32>
    %50 = math.exp %49 : vector<1x8x8xf32>
    %cst_16 = arith.constant dense<0.000000e+00> : vector<1x8xf32>
    %51 = vector.multi_reduction <add>, %50, %cst_16 [2] : vector<1x8x8xf32> to vector<1x8xf32>
    %52 = vector.shape_cast %51 : vector<1x8xf32> to vector<1x8x1xf32>
    %53 = tpu.reciprocal %52 {approx = true} : vector<1x8x1xf32> -> vector<1x8x1xf32>
    %54 = vector.broadcast %53 : vector<1x8x1xf32> to vector<1x8x8xf32>
    %55 = arith.mulf %50, %54 : vector<1x8x8xf32>
    "tpu.trace_start"() <{level = 10 : i32, message = "bqk,bkd->bqd"}> : () -> ()
    %cst_17 = arith.constant dense<0.000000e+00> : vector<1x8x16xf32>
    %56 = tpu.matmul %55, %42, %cst_17 {dimension_numbers = #tpu.dot_dimension_numbers<[2], [1], [1], [2], [0, 0, 0, 1, 1, 2], [0], [0]>} : vector<1x8x8xf32>, vector<1x8x16xf32>, vector<1x8x16xf32> -> vector<1x8x16xf32>
    "tpu.trace_stop"() : () -> ()
    %57 = vector.shape_cast %56 : vector<1x8x16xf32> to vector<8x16xf32>
    %58 = vector.extract_strided_slice %13 {offsets = [16, 0], sizes = [16, 32], strides = [1, 1]} : vector<32x32xf32> to vector<16x32xf32>
    %cst_18 = arith.constant dense<0.000000e+00> : vector<8x32xf32>
    %59 = tpu.matmul %57, %58, %cst_18 {dimension_numbers = #tpu.dot_dimension_numbers<[1], [0], [0], [1], [0, 0, 1, 1], [], []>} : vector<8x16xf32>, vector<16x32xf32>, vector<8x32xf32> -> vector<8x32xf32>
    %60 = arith.addf %36, %59 : vector<8x32xf32>
    %61 = arith.addf %60, %7 : vector<8x32xf32>
    %c288 = arith.constant 288 : index
    %c0_19 = arith.constant 0 : index
    %62 = vector.load %arg5[%c288, %c0_19] : memref<296x128xf32, #tpu.memory_space<vmem>>, vector<1x32xf32>
    %c289 = arith.constant 289 : index
    %c0_20 = arith.constant 0 : index
    %63 = vector.load %arg5[%c289, %c0_20] : memref<296x128xf32, #tpu.memory_space<vmem>>, vector<1x32xf32>
    %cst_21 = arith.constant dense<0.000000e+00> : vector<8xf32>
    %64 = vector.multi_reduction <add>, %61, %cst_21 [1] : vector<8x32xf32> to vector<8xf32>
    %65 = vector.shape_cast %64 : vector<8xf32> to vector<8x1xf32>
    %cst_22 = arith.constant 3.200000e+01 : f32
    %66 = vector.broadcast %cst_22 : f32 to vector<8x1xf32>
    %67 = arith.divf %65, %66 : vector<8x1xf32>
    %68 = vector.broadcast %67 : vector<8x1xf32> to vector<8x32xf32>
    %69 = arith.subf %61, %68 : vector<8x32xf32>
    %70 = arith.mulf %69, %69 : vector<8x32xf32>
    %cst_23 = arith.constant dense<0.000000e+00> : vector<8xf32>
    %71 = vector.multi_reduction <add>, %70, %cst_23 [1] : vector<8x32xf32> to vector<8xf32>
    %72 = vector.shape_cast %71 : vector<8xf32> to vector<8x1xf32>
    %cst_24 = arith.constant 3.200000e+01 : f32
    %73 = vector.broadcast %cst_24 : f32 to vector<8x1xf32>
    %74 = arith.divf %72, %73 : vector<8x1xf32>
    %75 = vector.broadcast %67 : vector<8x1xf32> to vector<8x32xf32>
    %76 = arith.subf %61, %75 : vector<8x32xf32>
    %cst_25 = arith.constant 9.99999974E-6 : f32
    %77 = vector.broadcast %cst_25 : f32 to vector<8x1xf32>
    %78 = arith.addf %74, %77 : vector<8x1xf32>
    %79 = math.rsqrt %78 : vector<8x1xf32>
    %80 = vector.broadcast %79 : vector<8x1xf32> to vector<8x32xf32>
    %81 = arith.mulf %76, %80 : vector<8x32xf32>
    %82 = vector.broadcast %62 : vector<1x32xf32> to vector<8x32xf32>
    %83 = arith.mulf %81, %82 : vector<8x32xf32>
    %84 = vector.broadcast %63 : vector<1x32xf32> to vector<8x32xf32>
    %85 = arith.addf %83, %84 : vector<8x32xf32>
    %c64 = arith.constant 64 : index
    %c0_26 = arith.constant 0 : index
    %86 = vector.load %arg5[%c64, %c0_26] : memref<296x128xf32, #tpu.memory_space<vmem>>, vector<32x32xf32>
    %cst_27 = arith.constant dense<0.000000e+00> : vector<8x32xf32>
    %87 = tpu.matmul %85, %86, %cst_27 {dimension_numbers = #tpu.dot_dimension_numbers<[1], [0], [0], [1], [0, 0, 1, 1], [], []>} : vector<8x32xf32>, vector<32x32xf32>, vector<8x32xf32> -> vector<8x32xf32>
    %c0_28 = arith.constant 0 : index
    %c0_29 = arith.constant 0 : index
    %88 = vector.load %arg3[%c0_28, %c0_29] : memref<8x32xf32, #tpu.memory_space<vmem>>, vector<8x32xf32>
    %c96 = arith.constant 96 : index
    %c0_30 = arith.constant 0 : index
    %89 = vector.load %arg5[%c96, %c0_30] : memref<296x128xf32, #tpu.memory_space<vmem>>, vector<32x32xf32>
    %cst_31 = arith.constant dense<0.000000e+00> : vector<8x32xf32>
    %90 = tpu.matmul %88, %89, %cst_31 {dimension_numbers = #tpu.dot_dimension_numbers<[1], [0], [0], [1], [0, 0, 1, 1], [], []>} : vector<8x32xf32>, vector<32x32xf32>, vector<8x32xf32> -> vector<8x32xf32>
    %c0_32 = arith.constant 0 : index
    %c0_33 = arith.constant 0 : index
    %91 = vector.load %arg2[%c0_32, %c0_33] : memref<8x32xf32, #tpu.memory_space<vmem>>, vector<8x32xf32>
    %c128 = arith.constant 128 : index
    %c0_34 = arith.constant 0 : index
    %92 = vector.load %arg5[%c128, %c0_34] : memref<296x128xf32, #tpu.memory_space<vmem>>, vector<32x32xf32>
    %cst_35 = arith.constant dense<0.000000e+00> : vector<8x32xf32>
    %93 = tpu.matmul %91, %92, %cst_35 {dimension_numbers = #tpu.dot_dimension_numbers<[1], [0], [0], [1], [0, 0, 1, 1], [], []>} : vector<8x32xf32>, vector<32x32xf32>, vector<8x32xf32> -> vector<8x32xf32>
    %c160 = arith.constant 160 : index
    %c0_36 = arith.constant 0 : index
    %94 = vector.load %arg5[%c160, %c0_36] : memref<296x128xf32, #tpu.memory_space<vmem>>, vector<32x32xf32>
    %95 = vector.extract_strided_slice %87 {offsets = [0, 0], sizes = [8, 16], strides = [1, 1]} : vector<8x32xf32> to vector<8x16xf32>
    %96 = vector.shape_cast %95 : vector<8x16xf32> to vector<1x8x16xf32>
    %97 = vector.extract_strided_slice %90 {offsets = [0, 0], sizes = [8, 16], strides = [1, 1]} : vector<8x32xf32> to vector<8x16xf32>
    %98 = vector.shape_cast %97 : vector<8x16xf32> to vector<1x8x16xf32>
    %99 = vector.extract_strided_slice %93 {offsets = [0, 0], sizes = [8, 16], strides = [1, 1]} : vector<8x32xf32> to vector<8x16xf32>
    %100 = vector.shape_cast %99 : vector<8x16xf32> to vector<1x8x16xf32>
    "tpu.trace_start"() <{level = 10 : i32, message = "bqd,bkd->bqk"}> : () -> ()
    %cst_37 = arith.constant dense<0.000000e+00> : vector<1x8x8xf32>
    %101 = tpu.matmul %96, %98, %cst_37 {dimension_numbers = #tpu.dot_dimension_numbers<[2], [2], [1], [1], [0, 0, 0, 1, 1, 1], [0], [0]>} : vector<1x8x16xf32>, vector<1x8x16xf32>, vector<1x8x8xf32> -> vector<1x8x8xf32>
    "tpu.trace_stop"() : () -> ()
    %102 = vector.broadcast %6 : vector<1x1x8xf32> to vector<1x8x8xf32>
    %103 = arith.addf %101, %102 : vector<1x8x8xf32>
    %cst_38 = arith.constant dense<0xFF800000> : vector<1x8xf32>
    %104 = vector.multi_reduction <maximumf>, %103, %cst_38 [2] : vector<1x8x8xf32> to vector<1x8xf32>
    %105 = vector.shape_cast %104 : vector<1x8xf32> to vector<1x8x1xf32>
    %106 = vector.broadcast %105 : vector<1x8x1xf32> to vector<1x8x8xf32>
    %107 = arith.subf %103, %106 : vector<1x8x8xf32>
    %108 = math.exp %107 : vector<1x8x8xf32>
    %cst_39 = arith.constant dense<0.000000e+00> : vector<1x8xf32>
    %109 = vector.multi_reduction <add>, %108, %cst_39 [2] : vector<1x8x8xf32> to vector<1x8xf32>
    %110 = vector.shape_cast %109 : vector<1x8xf32> to vector<1x8x1xf32>
    %111 = tpu.reciprocal %110 {approx = true} : vector<1x8x1xf32> -> vector<1x8x1xf32>
    %112 = vector.broadcast %111 : vector<1x8x1xf32> to vector<1x8x8xf32>
    %113 = arith.mulf %108, %112 : vector<1x8x8xf32>
    "tpu.trace_start"() <{level = 10 : i32, message = "bqk,bkd->bqd"}> : () -> ()
    %cst_40 = arith.constant dense<0.000000e+00> : vector<1x8x16xf32>
    %114 = tpu.matmul %113, %100, %cst_40 {dimension_numbers = #tpu.dot_dimension_numbers<[2], [1], [1], [2], [0, 0, 0, 1, 1, 2], [0], [0]>} : vector<1x8x8xf32>, vector<1x8x16xf32>, vector<1x8x16xf32> -> vector<1x8x16xf32>
    "tpu.trace_stop"() : () -> ()
    %115 = vector.shape_cast %114 : vector<1x8x16xf32> to vector<8x16xf32>
    %116 = vector.extract_strided_slice %94 {offsets = [0, 0], sizes = [16, 32], strides = [1, 1]} : vector<32x32xf32> to vector<16x32xf32>
    %cst_41 = arith.constant dense<0.000000e+00> : vector<8x32xf32>
    %117 = tpu.matmul %115, %116, %cst_41 {dimension_numbers = #tpu.dot_dimension_numbers<[1], [0], [0], [1], [0, 0, 1, 1], [], []>} : vector<8x16xf32>, vector<16x32xf32>, vector<8x32xf32> -> vector<8x32xf32>
    %118 = vector.extract_strided_slice %87 {offsets = [0, 16], sizes = [8, 16], strides = [1, 1]} : vector<8x32xf32> to vector<8x16xf32>
    %119 = vector.shape_cast %118 : vector<8x16xf32> to vector<1x8x16xf32>
    %120 = vector.extract_strided_slice %90 {offsets = [0, 16], sizes = [8, 16], strides = [1, 1]} : vector<8x32xf32> to vector<8x16xf32>
    %121 = vector.shape_cast %120 : vector<8x16xf32> to vector<1x8x16xf32>
    %122 = vector.extract_strided_slice %93 {offsets = [0, 16], sizes = [8, 16], strides = [1, 1]} : vector<8x32xf32> to vector<8x16xf32>
    %123 = vector.shape_cast %122 : vector<8x16xf32> to vector<1x8x16xf32>
    "tpu.trace_start"() <{level = 10 : i32, message = "bqd,bkd->bqk"}> : () -> ()
    %cst_42 = arith.constant dense<0.000000e+00> : vector<1x8x8xf32>
    %124 = tpu.matmul %119, %121, %cst_42 {dimension_numbers = #tpu.dot_dimension_numbers<[2], [2], [1], [1], [0, 0, 0, 1, 1, 1], [0], [0]>} : vector<1x8x16xf32>, vector<1x8x16xf32>, vector<1x8x8xf32> -> vector<1x8x8xf32>
    "tpu.trace_stop"() : () -> ()
    %125 = vector.broadcast %6 : vector<1x1x8xf32> to vector<1x8x8xf32>
    %126 = arith.addf %124, %125 : vector<1x8x8xf32>
    %cst_43 = arith.constant dense<0xFF800000> : vector<1x8xf32>
    %127 = vector.multi_reduction <maximumf>, %126, %cst_43 [2] : vector<1x8x8xf32> to vector<1x8xf32>
    %128 = vector.shape_cast %127 : vector<1x8xf32> to vector<1x8x1xf32>
    %129 = vector.broadcast %128 : vector<1x8x1xf32> to vector<1x8x8xf32>
    %130 = arith.subf %126, %129 : vector<1x8x8xf32>
    %131 = math.exp %130 : vector<1x8x8xf32>
    %cst_44 = arith.constant dense<0.000000e+00> : vector<1x8xf32>
    %132 = vector.multi_reduction <add>, %131, %cst_44 [2] : vector<1x8x8xf32> to vector<1x8xf32>
    %133 = vector.shape_cast %132 : vector<1x8xf32> to vector<1x8x1xf32>
    %134 = tpu.reciprocal %133 {approx = true} : vector<1x8x1xf32> -> vector<1x8x1xf32>
    %135 = vector.broadcast %134 : vector<1x8x1xf32> to vector<1x8x8xf32>
    %136 = arith.mulf %131, %135 : vector<1x8x8xf32>
    "tpu.trace_start"() <{level = 10 : i32, message = "bqk,bkd->bqd"}> : () -> ()
    %cst_45 = arith.constant dense<0.000000e+00> : vector<1x8x16xf32>
    %137 = tpu.matmul %136, %123, %cst_45 {dimension_numbers = #tpu.dot_dimension_numbers<[2], [1], [1], [2], [0, 0, 0, 1, 1, 2], [0], [0]>} : vector<1x8x8xf32>, vector<1x8x16xf32>, vector<1x8x16xf32> -> vector<1x8x16xf32>
    "tpu.trace_stop"() : () -> ()
    %138 = vector.shape_cast %137 : vector<1x8x16xf32> to vector<8x16xf32>
    %139 = vector.extract_strided_slice %94 {offsets = [16, 0], sizes = [16, 32], strides = [1, 1]} : vector<32x32xf32> to vector<16x32xf32>
    %cst_46 = arith.constant dense<0.000000e+00> : vector<8x32xf32>
    %140 = tpu.matmul %138, %139, %cst_46 {dimension_numbers = #tpu.dot_dimension_numbers<[1], [0], [0], [1], [0, 0, 1, 1], [], []>} : vector<8x16xf32>, vector<16x32xf32>, vector<8x32xf32> -> vector<8x32xf32>
    %141 = arith.addf %117, %140 : vector<8x32xf32>
    %142 = arith.addf %141, %85 : vector<8x32xf32>
    %c290 = arith.constant 290 : index
    %c0_47 = arith.constant 0 : index
    %143 = vector.load %arg5[%c290, %c0_47] : memref<296x128xf32, #tpu.memory_space<vmem>>, vector<1x32xf32>
    %c291 = arith.constant 291 : index
    %c0_48 = arith.constant 0 : index
    %144 = vector.load %arg5[%c291, %c0_48] : memref<296x128xf32, #tpu.memory_space<vmem>>, vector<1x32xf32>
    %cst_49 = arith.constant dense<0.000000e+00> : vector<8xf32>
    %145 = vector.multi_reduction <add>, %142, %cst_49 [1] : vector<8x32xf32> to vector<8xf32>
    %146 = vector.shape_cast %145 : vector<8xf32> to vector<8x1xf32>
    %cst_50 = arith.constant 3.200000e+01 : f32
    %147 = vector.broadcast %cst_50 : f32 to vector<8x1xf32>
    %148 = arith.divf %146, %147 : vector<8x1xf32>
    %149 = vector.broadcast %148 : vector<8x1xf32> to vector<8x32xf32>
    %150 = arith.subf %142, %149 : vector<8x32xf32>
    %151 = arith.mulf %150, %150 : vector<8x32xf32>
    %cst_51 = arith.constant dense<0.000000e+00> : vector<8xf32>
    %152 = vector.multi_reduction <add>, %151, %cst_51 [1] : vector<8x32xf32> to vector<8xf32>
    %153 = vector.shape_cast %152 : vector<8xf32> to vector<8x1xf32>
    %cst_52 = arith.constant 3.200000e+01 : f32
    %154 = vector.broadcast %cst_52 : f32 to vector<8x1xf32>
    %155 = arith.divf %153, %154 : vector<8x1xf32>
    %156 = vector.broadcast %148 : vector<8x1xf32> to vector<8x32xf32>
    %157 = arith.subf %142, %156 : vector<8x32xf32>
    %cst_53 = arith.constant 9.99999974E-6 : f32
    %158 = vector.broadcast %cst_53 : f32 to vector<8x1xf32>
    %159 = arith.addf %155, %158 : vector<8x1xf32>
    %160 = math.rsqrt %159 : vector<8x1xf32>
    %161 = vector.broadcast %160 : vector<8x1xf32> to vector<8x32xf32>
    %162 = arith.mulf %157, %161 : vector<8x32xf32>
    %163 = vector.broadcast %143 : vector<1x32xf32> to vector<8x32xf32>
    %164 = arith.mulf %162, %163 : vector<8x32xf32>
    %165 = vector.broadcast %144 : vector<1x32xf32> to vector<8x32xf32>
    %166 = arith.addf %164, %165 : vector<8x32xf32>
    %c192 = arith.constant 192 : index
    %c0_54 = arith.constant 0 : index
    %167 = vector.load %arg5[%c192, %c0_54] : memref<296x128xf32, #tpu.memory_space<vmem>>, vector<32x64xf32>
    %cst_55 = arith.constant dense<0.000000e+00> : vector<8x64xf32>
    %168 = tpu.matmul %166, %167, %cst_55 {dimension_numbers = #tpu.dot_dimension_numbers<[1], [0], [0], [1], [0, 0, 1, 1], [], []>} : vector<8x32xf32>, vector<32x64xf32>, vector<8x64xf32> -> vector<8x64xf32>
    %c294 = arith.constant 294 : index
    %c0_56 = arith.constant 0 : index
    %169 = vector.load %arg5[%c294, %c0_56] : memref<296x128xf32, #tpu.memory_space<vmem>>, vector<1x64xf32>
    %170 = vector.broadcast %169 : vector<1x64xf32> to vector<8x64xf32>
    %171 = arith.addf %168, %170 : vector<8x64xf32>
    %cst_57 = arith.constant 0.000000e+00 : f32
    %172 = vector.broadcast %cst_57 : f32 to vector<8x64xf32>
    %173 = arith.maximumf %171, %172 : vector<8x64xf32>
    %c224 = arith.constant 224 : index
    %c0_58 = arith.constant 0 : index
    %174 = vector.load %arg5[%c224, %c0_58] : memref<296x128xf32, #tpu.memory_space<vmem>>, vector<64x32xf32>
    %cst_59 = arith.constant dense<0.000000e+00> : vector<8x32xf32>
    %175 = tpu.matmul %173, %174, %cst_59 {dimension_numbers = #tpu.dot_dimension_numbers<[1], [0], [0], [1], [0, 0, 1, 1], [], []>} : vector<8x64xf32>, vector<64x32xf32>, vector<8x32xf32> -> vector<8x32xf32>
    %c295 = arith.constant 295 : index
    %c0_60 = arith.constant 0 : index
    %176 = vector.load %arg5[%c295, %c0_60] : memref<296x128xf32, #tpu.memory_space<vmem>>, vector<1x32xf32>
    %177 = vector.broadcast %176 : vector<1x32xf32> to vector<8x32xf32>
    %178 = arith.addf %175, %177 : vector<8x32xf32>
    %179 = arith.addf %178, %166 : vector<8x32xf32>
    %c292 = arith.constant 292 : index
    %c0_61 = arith.constant 0 : index
    %180 = vector.load %arg5[%c292, %c0_61] : memref<296x128xf32, #tpu.memory_space<vmem>>, vector<1x32xf32>
    %c293 = arith.constant 293 : index
    %c0_62 = arith.constant 0 : index
    %181 = vector.load %arg5[%c293, %c0_62] : memref<296x128xf32, #tpu.memory_space<vmem>>, vector<1x32xf32>
    %cst_63 = arith.constant dense<0.000000e+00> : vector<8xf32>
    %182 = vector.multi_reduction <add>, %179, %cst_63 [1] : vector<8x32xf32> to vector<8xf32>
    %183 = vector.shape_cast %182 : vector<8xf32> to vector<8x1xf32>
    %cst_64 = arith.constant 3.200000e+01 : f32
    %184 = vector.broadcast %cst_64 : f32 to vector<8x1xf32>
    %185 = arith.divf %183, %184 : vector<8x1xf32>
    %186 = vector.broadcast %185 : vector<8x1xf32> to vector<8x32xf32>
    %187 = arith.subf %179, %186 : vector<8x32xf32>
    %188 = arith.mulf %187, %187 : vector<8x32xf32>
    %cst_65 = arith.constant dense<0.000000e+00> : vector<8xf32>
    %189 = vector.multi_reduction <add>, %188, %cst_65 [1] : vector<8x32xf32> to vector<8xf32>
    %190 = vector.shape_cast %189 : vector<8xf32> to vector<8x1xf32>
    %cst_66 = arith.constant 3.200000e+01 : f32
    %191 = vector.broadcast %cst_66 : f32 to vector<8x1xf32>
    %192 = arith.divf %190, %191 : vector<8x1xf32>
    %193 = vector.broadcast %185 : vector<8x1xf32> to vector<8x32xf32>
    %194 = arith.subf %179, %193 : vector<8x32xf32>
    %cst_67 = arith.constant 9.99999974E-6 : f32
    %195 = vector.broadcast %cst_67 : f32 to vector<8x1xf32>
    %196 = arith.addf %192, %195 : vector<8x1xf32>
    %197 = math.rsqrt %196 : vector<8x1xf32>
    %198 = vector.broadcast %197 : vector<8x1xf32> to vector<8x32xf32>
    %199 = arith.mulf %194, %198 : vector<8x32xf32>
    %200 = vector.broadcast %180 : vector<1x32xf32> to vector<8x32xf32>
    %201 = arith.mulf %199, %200 : vector<8x32xf32>
    %202 = vector.broadcast %181 : vector<1x32xf32> to vector<8x32xf32>
    %203 = arith.addf %201, %202 : vector<8x32xf32>
    %c0_68 = arith.constant 0 : index
    %c0_69 = arith.constant 0 : index
    %204 = vector.load %arg6[%c0_68, %c0_69] : memref<8x32xf32, #tpu.memory_space<vmem>>, vector<8x32xf32>
    tpu.vector_store %arg6[%c0_68, %c0_69], %203 {strides = array<i32>} : memref<8x32xf32, #tpu.memory_space<vmem>>, vector<8x32xf32>,
    return
  }
  func.func @transform_0(%arg0: i32) -> (i32, i32) {
    %c0_i32 = arith.constant 0 : i32
    %c0_i32_0 = arith.constant 0 : i32
    return %arg0, %c0_i32 : i32, i32
  }
  func.func @transform_1(%arg0: i32) -> (i32, i32) {
    %c0_i32 = arith.constant 0 : i32
    %c0_i32_0 = arith.constant 0 : i32
    return %arg0, %c0_i32 : i32, i32
  }
  func.func @transform_2(%arg0: i32) -> (i32, i32) {
    %c0_i32 = arith.constant 0 : i32
    %c0_i32_0 = arith.constant 0 : i32
    return %arg0, %c0_i32 : i32, i32
  }
  func.func @transform_3(%arg0: i32) -> (i32, i32, i32) {
    %c0_i32 = arith.constant 0 : i32
    %c0_i32_0 = arith.constant 0 : i32
    %c0_i32_1 = arith.constant 0 : i32
    return %arg0, %c0_i32, %c0_i32_0 : i32, i32, i32
  }
  func.func @transform_4(%arg0: i32) -> (i32, i32) {
    %c0_i32 = arith.constant 0 : i32
    %c0_i32_0 = arith.constant 0 : i32
    %c0_i32_1 = arith.constant 0 : i32
    return %c0_i32, %c0_i32_0 : i32, i32
  }
  func.func @transform_5(%arg0: i32) -> (i32, i32) {
    %c0_i32 = arith.constant 0 : i32
    %c0_i32_0 = arith.constant 0 : i32
    return %arg0, %c0_i32 : i32, i32
  }
}

</mosaic_0001>

<llo_original>
// kernel: tpu_custom_call.1
$region0: #{tpu_custom_call.1}
  #allocation0 [shape = 'u32[]', space=smem, size = 0x4, offset = 0x4, fixed_abs, tag = 'smem constant byte address 0x4 - core index']
  #allocation1 [shape = 'u32[72,128]{1,0:T(1,128)}', space=vmem, size = 0x9000, scoped, tag = 'internal scratch']
  %s0 = inlined_call_operand.hbm [shape: f32[16,32], index: 0, kind: input, shape index: {}]
  %s1 = inlined_call_operand.hbm [shape: f32[16,32], index: 1, kind: input, shape index: {}]
  %s2 = inlined_call_operand.hbm [shape: f32[16,32], index: 2, kind: input, shape index: {}]
  %s3 = inlined_call_operand.vmem [shape: f32[2,1,8], index: 3, kind: input, shape index: {}]
  %s4 = inlined_call_operand.hbm [shape: f32[296,128], index: 4, kind: input, shape index: {}]
  %s5 = inlined_call_operand.hbm [shape: f32[16,32], index: 5, kind: output, shape index: {}]
  %s6 = sld [smem:[#allocation0]]
  $region69: #{tpu_custom_call.1} parent=0
    _
  %s8 = ssub.s32 1, %s6
  %s9 = scalar_select 0, %s8, %s6
  $region1: #{tpu_custom_call.1} parent=0
    #allocation2 [shape = 'u8[8192]{0}', space=vmem, size = 0x2000, scoped, tag = 'input window, operand 0']
    #allocation3 [shape = 's32[2]{0}', space=sflag, size = 0x8, scoped, tag = 'scoped memory for tpu_custom_call.1']
    #allocation4 [shape = 's32[2]{0}', space=sflag, size = 0x8, scoped, tag = 'scoped memory for tpu_custom_call.1']
    #allocation5 [shape = 'u8[8192]{0}', space=vmem, size = 0x2000, scoped, tag = 'input window, operand 1']
    #allocation6 [shape = 's32[2]{0}', space=sflag, size = 0x8, scoped, tag = 'scoped memory for tpu_custom_call.1']
    #allocation7 [shape = 'u8[8192]{0}', space=vmem, size = 0x2000, scoped, tag = 'input window, operand 2']
    #allocation8 [shape = 'u8[151552]{0}', space=vmem, size = 0x25000, scoped, tag = 'input window, operand 4, single buffered']
    #allocation9 [shape = 's32[1]{0}', space=sflag, size = 0x4, scoped, tag = 'scoped memory for tpu_custom_call.1']
    #allocation10 [shape = 'u8[8192]{0}', space=vmem, size = 0x2000, scoped, tag = 'output window, operand 0']
    %10 = vsyncpa [#allocation3], 0
    %s11 = scalar_lea.sflag [#allocation3], 1
    %12 = vsyncpa %s11, 0
    %13 = vsyncpa [#allocation6], 0
    %s14 = scalar_lea.sflag [#allocation6], 1
    %15 = vsyncpa %s14, 0
    %16 = vsyncpa [#allocation9], 0
    %17 = vsyncpa [#allocation4], 0
    %s18 = scalar_lea.sflag [#allocation4], 1
    %19 = vsyncpa %s18, 0
    loop: start=0, step=1, limit=4
    $region2: #{tpu_custom_call.1} parent=1 // loop_pre_header
      _
    $region3: #{tpu_custom_call.1} parent=1 // loop_header
      %s21 = sphi 0, %s25
      %p22 = scmp.ge.s32.totalorder %s21, 4
      %s31 = sphi 0, %s33
      %s34 = sphi 0, %s31
      %s35 = sphi 0, %s34
      %s51 = sphi 0, %s35
      %s57 = sphi 0, %s59
      %s60 = sphi 0, %s57
      %s61 = sphi 0, %s60
      %s77 = sphi 0, %s61
      %s83 = sphi 0, %s85
      %s86 = sphi 0, %s83
      %s87 = sphi 0, %s86
      %s103 = sphi 0, %s87
      %s109 = sphi 0, %s111
      %s112 = sphi 0, %s109
      %s113 = sphi 0, %s112
      %s129 = sphi 0, %s113
      %s133 = sphi 0, %s133
      %s135 = sphi 0, %s133
      %s136 = sphi 0, %s135
      %s150 = sphi 0, %s136
      %s156 = sphi 0, %s158
      %s159 = sphi 0, %s156
      %s160 = sphi 0, %s159
      %s176 = sphi 0, %s160
    $region4: #{tpu_custom_call.1} parent=1 // loop_header_branch
      %24 = sbr.rel (%p22) target = $region8
    $region5: #{tpu_custom_call.1} parent=1 // loop_body
      %s26 = ssub.s32 %s21, 1
      %s27 = ssub.s32 %s21, 2
      %s28 = sadd.s32 %s21, 1
      %s29 = ssub.s32 %s21, %s28
      %p30 = scmp.eq.s32.totalorder %s29, 0
      %s32 = sadd.s32 %s31, 1
      %s33 = scalar_select %p30, %s31, %s32
      %p36 = pneg %p30
      %p37 = scmp.eq.s32.totalorder %s21, 1
      %p38 = por %p36, %p37
      %p39 = scmp.ne.s32.totalorder %s31, %s34
      %p40 = scmp.eq.s32.totalorder %s21, 0
      %p41 = por %p39, %p40
      %p42 = scmp.ne.s32.totalorder %s31, %s34
      %p43 = scmp.eq.s32.totalorder %s26, 1
      %p44 = por %p42, %p43
      %p45 = scmp.ne.s32.totalorder %s34, %s35
      %p46 = scmp.eq.s32.totalorder %s26, 0
      %p47 = por %p45, %p46
      %p48 = scmp.ne.s32.totalorder %s34, %s35
      %p49 = scmp.eq.s32.totalorder %s27, 1
      %p50 = por %p48, %p49
      %p52 = scmp.ne.s32.totalorder %s35, %s51
      %p53 = scmp.eq.s32.totalorder %s27, 0
      %p54 = por %p52, %p53
      %s55 = ssub.s32 %s21, %s28
      %p56 = scmp.eq.s32.totalorder %s55, 0
      %s58 = sadd.s32 %s57, 1
      %s59 = scalar_select %p56, %s57, %s58
      %p62 = pneg %p56
      %p63 = scmp.eq.s32.totalorder %s21, 1
      %p64 = por %p62, %p63
      %p65 = scmp.ne.s32.totalorder %s57, %s60
      %p66 = scmp.eq.s32.totalorder %s21, 0
      %p67 = por %p65, %p66
      %p68 = scmp.ne.s32.totalorder %s57, %s60
      %p69 = scmp.eq.s32.totalorder %s26, 1
      %p70 = por %p68, %p69
      %p71 = scmp.ne.s32.totalorder %s60, %s61
      %p72 = scmp.eq.s32.totalorder %s26, 0
      %p73 = por %p71, %p72
      %p74 = scmp.ne.s32.totalorder %s60, %s61
      %p75 = scmp.eq.s32.totalorder %s27, 1
      %p76 = por %p74, %p75
      %p78 = scmp.ne.s32.totalorder %s61, %s77
      %p79 = scmp.eq.s32.totalorder %s27, 0
      %p80 = por %p78, %p79
      %s81 = ssub.s32 %s21, %s28
      %p82 = scmp.eq.s32.totalorder %s81, 0
      %s84 = sadd.s32 %s83, 1
      %s85 = scalar_select %p82, %s83, %s84
      %p88 = pneg %p82
      %p89 = scmp.eq.s32.totalorder %s21, 1
      %p90 = por %p88, %p89
      %p91 = scmp.ne.s32.totalorder %s83, %s86
      %p92 = scmp.eq.s32.totalorder %s21, 0
      %p93 = por %p91, %p92
      %p94 = scmp.ne.s32.totalorder %s83, %s86
      %p95 = scmp.eq.s32.totalorder %s26, 1
      %p96 = por %p94, %p95
      %p97 = scmp.ne.s32.totalorder %s86, %s87
      %p98 = scmp.eq.s32.totalorder %s26, 0
      %p99 = por %p97, %p98
      %p100 = scmp.ne.s32.totalorder %s86, %s87
      %p101 = scmp.eq.s32.totalorder %s27, 1
      %p102 = por %p100, %p101
      %p104 = scmp.ne.s32.totalorder %s87, %s103
      %p105 = scmp.eq.s32.totalorder %s27, 0
      %p106 = por %p104, %p105
      %s107 = ssub.s32 %s21, %s28
      %p108 = scmp.eq.s32.totalorder %s107, 0
      %s110 = sadd.s32 %s109, 1
      %s111 = scalar_select %p108, %s109, %s110
      %p114 = pneg %p108
      %p115 = scmp.eq.s32.totalorder %s21, 1
      %p116 = por %p114, %p115
      %p117 = scmp.ne.s32.totalorder %s109, %s112
      %p118 = scmp.eq.s32.totalorder %s21, 0
      %p119 = por %p117, %p118
      %p120 = scmp.ne.s32.totalorder %s109, %s112
      %p121 = scmp.eq.s32.totalorder %s26, 1
      %p122 = por %p120, %p121
      %p123 = scmp.ne.s32.totalorder %s112, %s113
      %p124 = scmp.eq.s32.totalorder %s26, 0
      %p125 = por %p123, %p124
      %p126 = scmp.ne.s32.totalorder %s112, %s113
      %p127 = scmp.eq.s32.totalorder %s27, 1
      %p128 = por %p126, %p127
      %p130 = scmp.ne.s32.totalorder %s113, %s129
      %p131 = scmp.eq.s32.totalorder %s27, 0
      %p132 = por %p130, %p131
      %s134 = sadd.s32 %s133, 1
      %p137 = scmp.eq.s32.totalorder %s21, 1
      %p138 = scmp.ne.s32.totalorder %s133, %s135
      %p139 = scmp.eq.s32.totalorder %s21, 0
      %p140 = por %p138, %p139
      %p141 = scmp.ne.s32.totalorder %s133, %s135
      %p142 = scmp.eq.s32.totalorder %s26, 1
      %p143 = por %p141, %p142
      %p144 = scmp.ne.s32.totalorder %s135, %s136
      %p145 = scmp.eq.s32.totalorder %s26, 0
      %p146 = por %p144, %p145
      %p147 = scmp.ne.s32.totalorder %s135, %s136
      %p148 = scmp.eq.s32.totalorder %s27, 1
      %p149 = por %p147, %p148
      %p151 = scmp.ne.s32.totalorder %s136, %s150
      %p152 = scmp.eq.s32.totalorder %s27, 0
      %p153 = por %p151, %p152
      %s154 = ssub.s32 %s21, %s28
      %p155 = scmp.eq.s32.totalorder %s154, 0
      %s157 = sadd.s32 %s156, 1
      %s158 = scalar_select %p155, %s156, %s157
      %p161 = pneg %p155
      %p162 = scmp.eq.s32.totalorder %s21, 1
      %p163 = por %p161, %p162
      %p164 = scmp.ne.s32.totalorder %s156, %s159
      %p165 = scmp.eq.s32.totalorder %s21, 0
      %p166 = por %p164, %p165
      %p167 = scmp.ne.s32.totalorder %s156, %s159
      %p168 = scmp.eq.s32.totalorder %s26, 1
      %p169 = por %p167, %p168
      %p170 = scmp.ne.s32.totalorder %s159, %s160
      %p171 = scmp.eq.s32.totalorder %s26, 0
      %p172 = por %p170, %p171
      %p173 = scmp.ne.s32.totalorder %s159, %s160
      %p174 = scmp.eq.s32.totalorder %s27, 1
      %p175 = por %p173, %p174
      %p177 = scmp.ne.s32.totalorder %s160, %s176
      %p178 = scmp.eq.s32.totalorder %s27, 0
      %p179 = por %p177, %p178
      %p180 = scmp.le.s32.totalorder 1, %s21
      %p181 = scmp.lt.s32.totalorder %s21, 3
      %p182 = pnand %p180, %p181
      %p183 = pneg %p182
      // Predicated region
      $region9: #{tpu_custom_call.1} parent=5 // pred_check
        _
      $region10: #{tpu_custom_call.1} parent=5 // pred_check_branch
        %185 = sbr.rel (%p182) target = $region12
      $region11: #{tpu_custom_call.1} parent=5 // pred_region
        %s186 = ssub.s32 %s21, 1
        // Predicated region
        $region13: #{tpu_custom_call.1} parent=11 // pred_check
          %p187 = pneg %p146
        $region14: #{tpu_custom_call.1} parent=11 // pred_check_branch
          %189 = sbr.rel (%p187) target = $region16
        $region15: #{tpu_custom_call.1} parent=11 // pred_region
          %191 = vsyncadd [#allocation9], 0
          %s192 = sshll.u32 %s4, 4
          %s193 = int_to_ptr.hbm [resolvable:$true] %s192
          %s194 = sshll.u32 [#allocation8], 4
          %s195 = int_to_ptr.vmem [resolvable:$true] %s194
          %200 = dma.hbm_to_vmem [thread:$0]  %s193, 4736, %s195, [#allocation9], 128, 128, 8
        $region16: #{tpu_custom_call.1} parent=11 // pred_fallthru
          _
      $region12: #{tpu_custom_call.1} parent=5 // pred_fallthru
        _
      %p201 = scmp.lt.s32.totalorder %s21, 2
      // Predicated region
      $region17: #{tpu_custom_call.1} parent=5 // pred_check
        %p202 = pneg %p201
      $region18: #{tpu_custom_call.1} parent=5 // pred_check_branch
        %204 = sbr.rel (%p202) target = $region20
      $region19: #{tpu_custom_call.1} parent=5 // pred_region
        // Predicated region
        $region21: #{tpu_custom_call.1} parent=19 // pred_check
          %p205 = pneg %p41
        $region22: #{tpu_custom_call.1} parent=19 // pred_check_branch
          %207 = sbr.rel (%p205) target = $region24
        $region23: #{tpu_custom_call.1} parent=19 // pred_region
          %s208 = sand.u32 %s31, 1
          %s209 = scalar_lea.sflag [#allocation3], %s208
          %s210 = sand.u32 %s31, 1
          %s211 = smul.addr %s210, 8
          %s212 = scalar_lea.vmem [#allocation2], %s211
          %214 = vsyncadd %s209, 0
          %s215 = smul.addr %s21, 8
          %s216 = scalar_lea.hbm %s0, %s215
          %s218 = sshll.u32 %s216, 4
          %s219 = int_to_ptr.hbm [resolvable:$true] %s218
          %s220 = sshll.u32 %s212, 4
          %s221 = int_to_ptr.vmem [resolvable:$true] %s220
          %223 = dma.hbm_to_vmem [thread:$0]  %s219, 128, %s221, %s209
        $region24: #{tpu_custom_call.1} parent=19 // pred_fallthru
          _
        // Predicated region
        $region25: #{tpu_custom_call.1} parent=19 // pred_check
          %p224 = pneg %p67
        $region26: #{tpu_custom_call.1} parent=19 // pred_check_branch
          %226 = sbr.rel (%p224) target = $region28
        $region27: #{tpu_custom_call.1} parent=19 // pred_region
          %s227 = sand.u32 %s21, 1
          %s228 = scalar_lea.sflag [#allocation6], %s227
          %s229 = sand.u32 %s57, 1
          %s230 = smul.addr %s229, 8
          %s231 = scalar_lea.vmem [#allocation5], %s230
          %233 = vsyncadd %s228, 0
          %s234 = smul.addr %s21, 8
          %s235 = scalar_lea.hbm %s1, %s234
          %s237 = sshll.u32 %s235, 4
          %s238 = int_to_ptr.hbm [resolvable:$true] %s237
          %s239 = sshll.u32 %s231, 4
          %s240 = int_to_ptr.vmem [resolvable:$true] %s239
          %242 = dma.hbm_to_vmem [thread:$0]  %s238, 128, %s240, %s228
        $region28: #{tpu_custom_call.1} parent=19 // pred_fallthru
          _
        // Predicated region
        $region29: #{tpu_custom_call.1} parent=19 // pred_check
          %p243 = pneg %p93
        $region30: #{tpu_custom_call.1} parent=19 // pred_check_branch
          %245 = sbr.rel (%p243) target = $region32
        $region31: #{tpu_custom_call.1} parent=19 // pred_region
          %s246 = sand.u32 %s21, 1
          %s247 = scalar_lea.sflag [#allocation6], %s246
          %s248 = sand.u32 %s83, 1
          %s249 = smul.addr %s248, 8
          %s250 = scalar_lea.vmem [#allocation7], %s249
          %252 = vsyncadd %s247, 0
          %s253 = smul.addr %s21, 8
          %s254 = scalar_lea.hbm %s2, %s253
          %s256 = sshll.u32 %s254, 4
          %s257 = int_to_ptr.hbm [resolvable:$true] %s256
          %s258 = sshll.u32 %s250, 4
          %s259 = int_to_ptr.vmem [resolvable:$true] %s258
          %261 = dma.hbm_to_vmem [thread:$0]  %s257, 128, %s259, %s247
        $region32: #{tpu_custom_call.1} parent=19 // pred_fallthru
          _
        // Predicated region
        $region33: #{tpu_custom_call.1} parent=19 // pred_check
          %p262 = pneg %p119
        $region34: #{tpu_custom_call.1} parent=19 // pred_check_branch
          %264 = sbr.rel (%p262) target = $region36
        $region35: #{tpu_custom_call.1} parent=19 // pred_region
          %p265 = scmp.lt.s32.totalorder %s21, 1
          %s266 = scalar_select %p265, %s21, 1
          %s267 = scalar_lea.vmem %s3, %s266
        $region36: #{tpu_custom_call.1} parent=19 // pred_fallthru
          _
      $region20: #{tpu_custom_call.1} parent=5 // pred_fallthru
        _
      %p268 = scmp.le.s32.totalorder 1, %s21
      %p269 = scmp.lt.s32.totalorder %s21, 3
      %p270 = pnand %p268, %p269
      %p271 = pneg %p270
      // Predicated region
      $region37: #{tpu_custom_call.1} parent=5 // pred_check
        _
      $region38: #{tpu_custom_call.1} parent=5 // pred_check_branch
        %273 = sbr.rel (%p270) target = $region40
      $region39: #{tpu_custom_call.1} parent=5 // pred_region
        %s274 = ssub.s32 %s21, 1
        %s275 = sand.u32 %s34, 1
        %s276 = scalar_lea.sflag [#allocation3], %s275
        %s277 = sand.u32 %s34, 1
        %s278 = smul.addr %s277, 8
        %s279 = scalar_lea.vmem [#allocation2], %s278
        // Predicated region
        $region41: #{tpu_custom_call.1} parent=39 // pred_check
          %p280 = pneg %p47
        $region42: #{tpu_custom_call.1} parent=39 // pred_check_branch
          %282 = sbr.rel (%p280) target = $region44
        $region43: #{tpu_custom_call.1} parent=39 // pred_region
          %284 = dma.done %s276, 128
        $region44: #{tpu_custom_call.1} parent=39 // pred_fallthru
          _
        %s285 = sand.u32 %s26, 1
        %s286 = scalar_lea.sflag [#allocation6], %s285
        %s287 = sand.u32 %s60, 1
        %s288 = smul.addr %s287, 8
        %s289 = scalar_lea.vmem [#allocation5], %s288
        // Predicated region
        $region45: #{tpu_custom_call.1} parent=39 // pred_check
          %p290 = pneg %p73
        $region46: #{tpu_custom_call.1} parent=39 // pred_check_branch
          %292 = sbr.rel (%p290) target = $region48
        $region47: #{tpu_custom_call.1} parent=39 // pred_region
          %294 = dma.done %s286, 128
        $region48: #{tpu_custom_call.1} parent=39 // pred_fallthru
          _
        %s295 = sand.u32 %s26, 1
        %s296 = scalar_lea.sflag [#allocation6], %s295
        %s297 = sand.u32 %s86, 1
        %s298 = smul.addr %s297, 8
        %s299 = scalar_lea.vmem [#allocation7], %s298
        // Predicated region
        $region49: #{tpu_custom_call.1} parent=39 // pred_check
          %p300 = pneg %p99
        $region50: #{tpu_custom_call.1} parent=39 // pred_check_branch
          %302 = sbr.rel (%p300) target = $region52
        $region51: #{tpu_custom_call.1} parent=39 // pred_region
          %304 = dma.done %s296, 128
        $region52: #{tpu_custom_call.1} parent=39 // pred_fallthru
          _
        // Predicated region
        $region53: #{tpu_custom_call.1} parent=39 // pred_check
          %p305 = pneg %p146
        $region54: #{tpu_custom_call.1} parent=39 // pred_check_branch
          %307 = sbr.rel (%p305) target = $region56
        $region55: #{tpu_custom_call.1} parent=39 // pred_region
          %309 = dma.done [#allocation9], 4736
        $region56: #{tpu_custom_call.1} parent=39 // pred_fallthru
          _
        %s310 = sand.u32 %s34, 1
        %s311 = scalar_lea.sflag [#allocation3], %s310
        %s312 = sand.u32 %s34, 1
        %s313 = smul.addr %s312, 8
        %s314 = scalar_lea.vmem [#allocation2], %s313
        %p315 = pneg %p47
        %p316 = pneg %p44
        %s317 = sand.u32 %s26, 1
        %s318 = scalar_lea.sflag [#allocation6], %s317
        %s319 = sand.u32 %s60, 1
        %s320 = smul.addr %s319, 8
        %s321 = scalar_lea.vmem [#allocation5], %s320
        %p322 = pneg %p73
        %p323 = pneg %p70
        %s324 = sand.u32 %s26, 1
        %s325 = scalar_lea.sflag [#allocation6], %s324
        %s326 = sand.u32 %s86, 1
        %s327 = smul.addr %s326, 8
        %s328 = scalar_lea.vmem [#allocation7], %s327
        %p329 = pneg %p99
        %p330 = pneg %p96
        %p331 = scmp.lt.s32.totalorder %s26, 1
        %s332 = scalar_select %p331, %s26, 1
        %s333 = scalar_lea.vmem %s3, %s332
        %p334 = pneg %p125
        %p335 = pneg %p122
        %p336 = pneg %p146
        %p337 = pneg %p143
        %p338 = pneg %p172
        %p339 = pneg %p169
        %s340 = sand.u32 %s159, 1
        %s341 = scalar_lea.sflag [#allocation4], %s340
        %s342 = sand.u32 %s159, 1
        %s343 = smul.addr %s342, 8
        %s344 = scalar_lea.vmem [#allocation10], %s343
        %p345 = scmp.lt.s32.totalorder %s26, 1
        %s346 = scalar_select %p345, %s26, 1
        %s347 = scalar_lea.vmem %s3, %s346
        %v348 = vlaneseq
        %v349 = vshrl.u32 %v348, 7
        %v350 = vlaneseq
        %v351 = vand.u32 %v350, 127
        %vm352 = vcmp.le.s32.totalorder %v351, %v349
        %v353 = vsel %vm352, 0.0, -1.767767e+19
        %v354 = vld [vmem:[%s347] sm:$0x1]
        %v355 = vld [vmem:[%s279] sm:$0xff]
        %v356 = vld [vmem:[#allocation8] sm:$0xff]
        %v357 = vld [vmem:[#allocation8 + $0x8] sm:$0xff]
        %v358 = vld [vmem:[#allocation8 + $0x10] sm:$0xff]
        %v359 = vld [vmem:[#allocation8 + $0x18] sm:$0xff]
        %vm360 = vcmask 261120
        %v362 = vsel %vm360, %v355, 0
        %364 = vmatpush.msra.mxu0 0.0
        %365 = vmatpush.msra.mxu0 0.0
        %366 = vmatpush.msra.mxu0 0.0
        %367 = vmatpush.msra.mxu0 0.0
        %368 = vmatpush.msra.mxu0 0.0
        %369 = vmatpush.msra.mxu0 0.0
        %370 = vmatpush.msra.mxu0 0.0
        %371 = vmatpush.msra.mxu0 0.0
        %372 = vmatpush.msra.mxu0 0.0
        %373 = vmatpush.msra.mxu0 0.0
        %374 = vmatpush.msra.mxu0 0.0
        %375 = vmatpush.msra.mxu0 0.0
        %376 = vmatpush.msra.mxu0 %v359
        %377 = vmatpush.msra.mxu0 %v358
        %378 = vmatpush.msra.mxu0 %v357
        %379 = vmatpush.msra.mxu0 %v356
        %380 = vmatmul.f32.gmra.mxu0 %v362
        %v381 = vpop.f32.mrf.mxu0
        %v382 = vadd.f32 0.0, %v381
        %383 = vdwg.mxu0
        %v384 = vld [vmem:[#allocation8 + $0x20] sm:$0xff]
        %v385 = vld [vmem:[#allocation8 + $0x28] sm:$0xff]
        %v386 = vld [vmem:[#allocation8 + $0x30] sm:$0xff]
        %v387 = vld [vmem:[#allocation8 + $0x38] sm:$0xff]
        %389 = vrot.lane.b32.xlu0 %v382, 96
        %v390 = vpop.permute.xlu0 %389
        %vm391 = vcmask 130048
        %v392 = vsel %vm391, %v382, 0
        %v394 = vsel %vm391, %v390, 0
        %396 = vmatpush.xpose.msra.mxu0 0.0
        %397 = vmatpush.xpose.msra.mxu0 0.0
        %398 = vmatpush.xpose.msra.mxu0 0.0
        %399 = vmatpush.xpose.msra.mxu0 0.0
        %400 = vmatpush.xpose.msra.mxu0 0.0
        %401 = vmatpush.xpose.msra.mxu0 0.0
        %402 = vmatpush.xpose.msra.mxu0 0.0
        %403 = vmatpush.xpose.msra.mxu0 0.0
        %404 = vmatpush.xpose.msra.mxu0 0.0
        %405 = vmatpush.xpose.msra.mxu0 0.0
        %406 = vmatpush.xpose.msra.mxu0 0.0
        %407 = vmatpush.xpose.msra.mxu0 0.0
        %408 = vmatpush.xpose.msra.mxu0 0.0
        %409 = vmatpush.xpose.msra.mxu0 0.0
        %410 = vmatpush.xpose.msra.mxu0 0.0
        %411 = vmatpush.xpose.msra.mxu0 %v394
        %412 = vmatmul.f32.gmra.mxu0 %v392
        %v413 = vpop.f32.mrf.mxu0
        %v414 = vadd.f32 %v353, %v413
        %415 = vdwg.mxu0
        %vm416 = vcmask 64512
        %v417 = vsel %vm416, %v414, -inf
        %418 = vmax.xlane.f32.xlu0 %v417
        %v419 = vpop.xlane.xlu0 %418
        %v420 = vsub.f32 %v414, %v419
        %v421 = vmul.f32 %v420, 1.442695
        %v422 = vpow.pop %v421
        %v423 = vsel %vm416, %v422, 0.0
        %424 = vadd.xlane.f32.xlu0 %v423
        %v425 = vpop.xlane.xlu0 %424
        %v426 = vrcp.pop %v425
        %v427 = vmul.f32 %v422, %v426
        %428 = vrot.lane.b32.xlu0 %v382, 64
        %v429 = vpop.permute.xlu0 %428
        %v432 = vsel %vm416, %v427, 0
        %434 = vmatpush.msra.mxu0 0.0
        %435 = vmatpush.msra.mxu0 0.0
        %436 = vmatpush.msra.mxu0 0.0
        %437 = vmatpush.msra.mxu0 0.0
        %438 = vmatpush.msra.mxu0 0.0
        %439 = vmatpush.msra.mxu0 0.0
        %440 = vmatpush.msra.mxu0 0.0
        %441 = vmatpush.msra.mxu0 0.0
        %442 = vmatpush.msra.mxu0 0.0
        %443 = vmatpush.msra.mxu0 0.0
        %444 = vmatpush.msra.mxu0 0.0
        %445 = vmatpush.msra.mxu0 0.0
        %446 = vmatpush.msra.mxu0 0.0
        %447 = vmatpush.msra.mxu0 0.0
        %448 = vmatpush.msra.mxu0 0.0
        %449 = vmatpush.msra.mxu0 %v429
        %450 = vmatmul.f32.gmra.mxu0 %v432
        %v451 = vpop.f32.mrf.mxu0
        %v452 = vadd.f32 0.0, %v451
        %453 = vdwg.mxu0
        %454 = vrot.lane.b32.xlu0 %v382, 112
        %v455 = vpop.permute.xlu0 %454
        %456 = vrot.lane.b32.xlu0 %v382, 80
        %v457 = vpop.permute.xlu0 %456
        %v458 = vsel %vm391, %v455, 0
        %v460 = vsel %vm391, %v457, 0
        %462 = vmatpush.xpose.msra.mxu0 0.0
        %463 = vmatpush.xpose.msra.mxu0 0.0
        %464 = vmatpush.xpose.msra.mxu0 0.0
        %465 = vmatpush.xpose.msra.mxu0 0.0
        %466 = vmatpush.xpose.msra.mxu0 0.0
        %467 = vmatpush.xpose.msra.mxu0 0.0
        %468 = vmatpush.xpose.msra.mxu0 0.0
        %469 = vmatpush.xpose.msra.mxu0 0.0
        %470 = vmatpush.xpose.msra.mxu0 0.0
        %471 = vmatpush.xpose.msra.mxu0 0.0
        %472 = vmatpush.xpose.msra.mxu0 0.0
        %473 = vmatpush.xpose.msra.mxu0 0.0
        %474 = vmatpush.xpose.msra.mxu0 0.0
        %475 = vmatpush.xpose.msra.mxu0 0.0
        %476 = vmatpush.xpose.msra.mxu0 0.0
        %477 = vmatpush.xpose.msra.mxu0 %v460
        %478 = vmatmul.f32.gmra.mxu0 %v458
        %v479 = vpop.f32.mrf.mxu0
        %v480 = vadd.f32 %v353, %v479
        %481 = vdwg.mxu0
        %v482 = vsel %vm416, %v480, -inf
        %483 = vmax.xlane.f32.xlu0 %v482
        %v484 = vpop.xlane.xlu0 %483
        %v485 = vsub.f32 %v480, %v484
        %v486 = vmul.f32 %v485, 1.442695
        %v487 = vpow.pop %v486
        %v488 = vsel %vm416, %v487, 0.0
        %489 = vadd.xlane.f32.xlu0 %v488
        %v490 = vpop.xlane.xlu0 %489
        %v491 = vrcp.pop %v490
        %v492 = vmul.f32 %v487, %v491
        %493 = vrot.lane.b32.xlu0 %v382, 48
        %v494 = vpop.permute.xlu0 %493
        %v497 = vsel %vm416, %v492, 0
        %499 = vmatpush.msra.mxu0 0.0
        %500 = vmatpush.msra.mxu0 0.0
        %501 = vmatpush.msra.mxu0 0.0
        %502 = vmatpush.msra.mxu0 0.0
        %503 = vmatpush.msra.mxu0 0.0
        %504 = vmatpush.msra.mxu0 0.0
        %505 = vmatpush.msra.mxu0 0.0
        %506 = vmatpush.msra.mxu0 0.0
        %507 = vmatpush.msra.mxu0 0.0
        %508 = vmatpush.msra.mxu0 0.0
        %509 = vmatpush.msra.mxu0 0.0
        %510 = vmatpush.msra.mxu0 0.0
        %511 = vmatpush.msra.mxu0 0.0
        %512 = vmatpush.msra.mxu0 0.0
        %513 = vmatpush.msra.mxu0 0.0
        %514 = vmatpush.msra.mxu0 %v494
        %515 = vmatmul.f32.gmra.mxu0 %v497
        %v516 = vpop.f32.mrf.mxu0
        %v517 = vadd.f32 0.0, %v516
        %518 = vdwg.mxu0
        %v520 = vsel %vm391, %v517, 0
        %522 = vmatpush.msra.mxu0 0.0
        %523 = vmatpush.msra.mxu0 0.0
        %524 = vmatpush.msra.mxu0 0.0
        %525 = vmatpush.msra.mxu0 0.0
        %526 = vmatpush.msra.mxu0 0.0
        %527 = vmatpush.msra.mxu0 0.0
        %528 = vmatpush.msra.mxu0 0.0
        %529 = vmatpush.msra.mxu0 0.0
        %530 = vmatpush.msra.mxu0 0.0
        %531 = vmatpush.msra.mxu0 0.0
        %532 = vmatpush.msra.mxu0 0.0
        %533 = vmatpush.msra.mxu0 0.0
        %534 = vmatpush.msra.mxu0 0.0
        %535 = vmatpush.msra.mxu0 0.0
        %536 = vmatpush.msra.mxu0 %v387
        %537 = vmatpush.msra.mxu0 %v386
        %538 = vmatmul.f32.gmra.mxu0 %v520
        %v539 = vpop.f32.mrf.mxu0
        %v540 = vadd.f32 0.0, %v539
        %541 = vdwg.mxu0
        %v543 = vsel %vm391, %v452, 0
        %545 = vmatpush.msra.mxu0 0.0
        %546 = vmatpush.msra.mxu0 0.0
        %547 = vmatpush.msra.mxu0 0.0
        %548 = vmatpush.msra.mxu0 0.0
        %549 = vmatpush.msra.mxu0 0.0
        %550 = vmatpush.msra.mxu0 0.0
        %551 = vmatpush.msra.mxu0 0.0
        %552 = vmatpush.msra.mxu0 0.0
        %553 = vmatpush.msra.mxu0 0.0
        %554 = vmatpush.msra.mxu0 0.0
        %555 = vmatpush.msra.mxu0 0.0
        %556 = vmatpush.msra.mxu0 0.0
        %557 = vmatpush.msra.mxu0 0.0
        %558 = vmatpush.msra.mxu0 0.0
        %559 = vmatpush.msra.mxu0 %v385
        %560 = vmatpush.msra.mxu0 %v384
        %561 = vmatmul.f32.gmra.mxu0 %v543
        %v562 = vpop.f32.mrf.mxu0
        %v563 = vadd.f32 %v540, %v562
        %564 = vdwg.mxu0
        %v565 = vadd.f32 %v563, %v355
        %v566 = vld [vmem:[#allocation8 + $0x120] sm:$0x1]
        %v567 = vld [vmem:[#allocation8 + $0x121] sm:$0x1]
        %v568 = vsel %vm360, %v565, 0.0
        %569 = vadd.xlane.f32.xlu0 %v568
        %v570 = vpop.xlane.xlu0 %569
        %v571 = vrcp.pop 32.0
        %v572 = vmul.f32 32.0, %v571
        %v573 = vsub.f32 1.0, %v572
        %v574 = vmul.f32 %v571, %v573
        %v575 = vadd.f32 %v571, %v574
        %vm576 = vweird.f32 %v571
        %v577 = vsel %vm576, %v571, %v575
        %v578 = vmul.f32 %v570, %v577
        %v579 = vsub.f32 %v565, %v578
        %v580 = vmul.f32 %v579, %v579
        %v581 = vsel %vm360, %v580, 0.0
        %582 = vadd.xlane.f32.xlu0 %v581
        %v583 = vpop.xlane.xlu0 %582
        %v584 = vmul.f32 %v583, %v577
        %v585 = vadd.f32 %v584, 1e-05
        %v586 = vrsqrt.pop %v585
        %v587 = vmul.f32 %v586, %v585
        %v588 = vmul.f32 %v587, %v586
        %v589 = vmul.f32 0.5, %v588
        %v590 = vsub.f32 1.5, %v589
        %v591 = vmul.f32 %v586, %v590
        %vm592 = vweird.f32 %v585
        %vm593 = vweird.f32 %v586
        %vm594 = vmor %vm592, %vm593
        %v595 = vsel %vm594, %v586, %v591
        %v596 = vmul.f32 %v579, %v595
        %v597 = vperm.slane %v566, 0
        %v598 = vmul.f32 %v596, %v597
        %v599 = vperm.slane %v567, 0
        %v600 = vadd.f32 %v598, %v599
        %v601 = vld [vmem:[#allocation8 + $0x40] sm:$0xff]
        %v602 = vld [vmem:[#allocation8 + $0x48] sm:$0xff]
        %v603 = vld [vmem:[#allocation8 + $0x50] sm:$0xff]
        %v604 = vld [vmem:[#allocation8 + $0x58] sm:$0xff]
        %v606 = vsel %vm360, %v600, 0
        %608 = vmatpush.msra.mxu0 0.0
        %609 = vmatpush.msra.mxu0 0.0
        %610 = vmatpush.msra.mxu0 0.0
        %611 = vmatpush.msra.mxu0 0.0
        %612 = vmatpush.msra.mxu0 0.0
        %613 = vmatpush.msra.mxu0 0.0
        %614 = vmatpush.msra.mxu0 0.0
        %615 = vmatpush.msra.mxu0 0.0
        %616 = vmatpush.msra.mxu0 0.0
        %617 = vmatpush.msra.mxu0 0.0
        %618 = vmatpush.msra.mxu0 0.0
        %619 = vmatpush.msra.mxu0 0.0
        %620 = vmatpush.msra.mxu0 %v604
        %621 = vmatpush.msra.mxu0 %v603
        %622 = vmatpush.msra.mxu0 %v602
        %623 = vmatpush.msra.mxu0 %v601
        %624 = vmatmul.f32.gmra.mxu0 %v606
        %v625 = vpop.f32.mrf.mxu0
        %v626 = vadd.f32 0.0, %v625
        %627 = vdwg.mxu0
        %v628 = vld [vmem:[%s299] sm:$0xff]
        %v629 = vld [vmem:[#allocation8 + $0x60] sm:$0xff]
        %v630 = vld [vmem:[#allocation8 + $0x68] sm:$0xff]
        %v631 = vld [vmem:[#allocation8 + $0x70] sm:$0xff]
        %v632 = vld [vmem:[#allocation8 + $0x78] sm:$0xff]
        %v634 = vsel %vm360, %v628, 0
        %636 = vmatpush.msra.mxu0 0.0
        %637 = vmatpush.msra.mxu0 0.0
        %638 = vmatpush.msra.mxu0 0.0
        %639 = vmatpush.msra.mxu0 0.0
        %640 = vmatpush.msra.mxu0 0.0
        %641 = vmatpush.msra.mxu0 0.0
        %642 = vmatpush.msra.mxu0 0.0
        %643 = vmatpush.msra.mxu0 0.0
        %644 = vmatpush.msra.mxu0 0.0
        %645 = vmatpush.msra.mxu0 0.0
        %646 = vmatpush.msra.mxu0 0.0
        %647 = vmatpush.msra.mxu0 0.0
        %648 = vmatpush.msra.mxu0 %v632
        %649 = vmatpush.msra.mxu0 %v631
        %650 = vmatpush.msra.mxu0 %v630
        %651 = vmatpush.msra.mxu0 %v629
        %652 = vmatmul.f32.gmra.mxu0 %v634
        %v653 = vpop.f32.mrf.mxu0
        %v654 = vadd.f32 0.0, %v653
        %655 = vdwg.mxu0
        %v656 = vld [vmem:[%s289] sm:$0xff]
        %v657 = vld [vmem:[#allocation8 + $0x80] sm:$0xff]
        %v658 = vld [vmem:[#allocation8 + $0x88] sm:$0xff]
        %v659 = vld [vmem:[#allocation8 + $0x90] sm:$0xff]
        %v660 = vld [vmem:[#allocation8 + $0x98] sm:$0xff]
        %v662 = vsel %vm360, %v656, 0
        %664 = vmatpush.msra.mxu0 0.0
        %665 = vmatpush.msra.mxu0 0.0
        %666 = vmatpush.msra.mxu0 0.0
        %667 = vmatpush.msra.mxu0 0.0
        %668 = vmatpush.msra.mxu0 0.0
        %669 = vmatpush.msra.mxu0 0.0
        %670 = vmatpush.msra.mxu0 0.0
        %671 = vmatpush.msra.mxu0 0.0
        %672 = vmatpush.msra.mxu0 0.0
        %673 = vmatpush.msra.mxu0 0.0
        %674 = vmatpush.msra.mxu0 0.0
        %675 = vmatpush.msra.mxu0 0.0
        %676 = vmatpush.msra.mxu0 %v660
        %677 = vmatpush.msra.mxu0 %v659
        %678 = vmatpush.msra.mxu0 %v658
        %679 = vmatpush.msra.mxu0 %v657
        %680 = vmatmul.f32.gmra.mxu0 %v662
        %v681 = vpop.f32.mrf.mxu0
        %v682 = vadd.f32 0.0, %v681
        %683 = vdwg.mxu0
        %v684 = vld [vmem:[#allocation8 + $0xa0] sm:$0xff]
        %v685 = vld [vmem:[#allocation8 + $0xa8] sm:$0xff]
        %v686 = vld [vmem:[#allocation8 + $0xb0] sm:$0xff]
        %v687 = vld [vmem:[#allocation8 + $0xb8] sm:$0xff]
        %v689 = vperm.slane %v354, 0
        %v692 = vsel %vm391, %v626, 0
        %v695 = vsel %vm391, %v654, 0
        %697 = vmatpush.xpose.msra.mxu0 0.0
        %698 = vmatpush.xpose.msra.mxu0 0.0
        %699 = vmatpush.xpose.msra.mxu0 0.0
        %700 = vmatpush.xpose.msra.mxu0 0.0
        %701 = vmatpush.xpose.msra.mxu0 0.0
        %702 = vmatpush.xpose.msra.mxu0 0.0
        %703 = vmatpush.xpose.msra.mxu0 0.0
        %704 = vmatpush.xpose.msra.mxu0 0.0
        %705 = vmatpush.xpose.msra.mxu0 0.0
        %706 = vmatpush.xpose.msra.mxu0 0.0
        %707 = vmatpush.xpose.msra.mxu0 0.0
        %708 = vmatpush.xpose.msra.mxu0 0.0
        %709 = vmatpush.xpose.msra.mxu0 0.0
        %710 = vmatpush.xpose.msra.mxu0 0.0
        %711 = vmatpush.xpose.msra.mxu0 0.0
        %712 = vmatpush.xpose.msra.mxu0 %v695
        %713 = vmatmul.f32.gmra.mxu0 %v692
        %v714 = vpop.f32.mrf.mxu0
        %v715 = vadd.f32 %v689, %v714
        %716 = vdwg.mxu0
        %v717 = vsel %vm416, %v715, -inf
        %718 = vmax.xlane.f32.xlu0 %v717
        %v719 = vpop.xlane.xlu0 %718
        %v720 = vsub.f32 %v715, %v719
        %v721 = vmul.f32 %v720, 1.442695
        %v722 = vpow.pop %v721
        %v723 = vsel %vm416, %v722, 0.0
        %724 = vadd.xlane.f32.xlu0 %v723
        %v725 = vpop.xlane.xlu0 %724
        %v726 = vrcp.pop %v725
        %v727 = vmul.f32 %v722, %v726
        %v729 = vsel %vm416, %v727, 0
        %731 = vmatpush.msra.mxu0 0.0
        %732 = vmatpush.msra.mxu0 0.0
        %733 = vmatpush.msra.mxu0 0.0
        %734 = vmatpush.msra.mxu0 0.0
        %735 = vmatpush.msra.mxu0 0.0
        %736 = vmatpush.msra.mxu0 0.0
        %737 = vmatpush.msra.mxu0 0.0
        %738 = vmatpush.msra.mxu0 0.0
        %739 = vmatpush.msra.mxu0 0.0
        %740 = vmatpush.msra.mxu0 0.0
        %741 = vmatpush.msra.mxu0 0.0
        %742 = vmatpush.msra.mxu0 0.0
        %743 = vmatpush.msra.mxu0 0.0
        %744 = vmatpush.msra.mxu0 0.0
        %745 = vmatpush.msra.mxu0 0.0
        %746 = vmatpush.msra.mxu0 %v682
        %747 = vmatmul.f32.gmra.mxu0 %v729
        %v748 = vpop.f32.mrf.mxu0
        %v749 = vadd.f32 0.0, %v748
        %750 = vdwg.mxu0
        %751 = vrot.lane.b32.xlu0 %v626, 112
        %v752 = vpop.permute.xlu0 %751
        %753 = vrot.lane.b32.xlu0 %v654, 112
        %v754 = vpop.permute.xlu0 %753
        %v755 = vsel %vm391, %v752, 0
        %v757 = vsel %vm391, %v754, 0
        %759 = vmatpush.xpose.msra.mxu0 0.0
        %760 = vmatpush.xpose.msra.mxu0 0.0
        %761 = vmatpush.xpose.msra.mxu0 0.0
        %762 = vmatpush.xpose.msra.mxu0 0.0
        %763 = vmatpush.xpose.msra.mxu0 0.0
        %764 = vmatpush.xpose.msra.mxu0 0.0
        %765 = vmatpush.xpose.msra.mxu0 0.0
        %766 = vmatpush.xpose.msra.mxu0 0.0
        %767 = vmatpush.xpose.msra.mxu0 0.0
        %768 = vmatpush.xpose.msra.mxu0 0.0
        %769 = vmatpush.xpose.msra.mxu0 0.0
        %770 = vmatpush.xpose.msra.mxu0 0.0
        %771 = vmatpush.xpose.msra.mxu0 0.0
        %772 = vmatpush.xpose.msra.mxu0 0.0
        %773 = vmatpush.xpose.msra.mxu0 0.0
        %774 = vmatpush.xpose.msra.mxu0 %v757
        %775 = vmatmul.f32.gmra.mxu0 %v755
        %v776 = vpop.f32.mrf.mxu0
        %v777 = vadd.f32 %v689, %v776
        %778 = vdwg.mxu0
        %v779 = vsel %vm416, %v777, -inf
        %780 = vmax.xlane.f32.xlu0 %v779
        %v781 = vpop.xlane.xlu0 %780
        %v782 = vsub.f32 %v777, %v781
        %v783 = vmul.f32 %v782, 1.442695
        %v784 = vpow.pop %v783
        %v785 = vsel %vm416, %v784, 0.0
        %786 = vadd.xlane.f32.xlu0 %v785
        %v787 = vpop.xlane.xlu0 %786
        %v788 = vrcp.pop %v787
        %v789 = vmul.f32 %v784, %v788
        %791 = vrot.lane.b32.xlu0 %v682, 112
        %v792 = vpop.permute.xlu0 %791
        %v795 = vsel %vm416, %v789, 0
        %797 = vmatpush.msra.mxu0 0.0
        %798 = vmatpush.msra.mxu0 0.0
        %799 = vmatpush.msra.mxu0 0.0
        %800 = vmatpush.msra.mxu0 0.0
        %801 = vmatpush.msra.mxu0 0.0
        %802 = vmatpush.msra.mxu0 0.0
        %803 = vmatpush.msra.mxu0 0.0
        %804 = vmatpush.msra.mxu0 0.0
        %805 = vmatpush.msra.mxu0 0.0
        %806 = vmatpush.msra.mxu0 0.0
        %807 = vmatpush.msra.mxu0 0.0
        %808 = vmatpush.msra.mxu0 0.0
        %809 = vmatpush.msra.mxu0 0.0
        %810 = vmatpush.msra.mxu0 0.0
        %811 = vmatpush.msra.mxu0 0.0
        %812 = vmatpush.msra.mxu0 %v792
        %813 = vmatmul.f32.gmra.mxu0 %v795
        %v814 = vpop.f32.mrf.mxu0
        %v815 = vadd.f32 0.0, %v814
        %816 = vdwg.mxu0
        %v818 = vsel %vm391, %v815, 0
        %820 = vmatpush.msra.mxu0 0.0
        %821 = vmatpush.msra.mxu0 0.0
        %822 = vmatpush.msra.mxu0 0.0
        %823 = vmatpush.msra.mxu0 0.0
        %824 = vmatpush.msra.mxu0 0.0
        %825 = vmatpush.msra.mxu0 0.0
        %826 = vmatpush.msra.mxu0 0.0
        %827 = vmatpush.msra.mxu0 0.0
        %828 = vmatpush.msra.mxu0 0.0
        %829 = vmatpush.msra.mxu0 0.0
        %830 = vmatpush.msra.mxu0 0.0
        %831 = vmatpush.msra.mxu0 0.0
        %832 = vmatpush.msra.mxu0 0.0
        %833 = vmatpush.msra.mxu0 0.0
        %834 = vmatpush.msra.mxu0 %v687
        %835 = vmatpush.msra.mxu0 %v686
        %836 = vmatmul.f32.gmra.mxu0 %v818
        %v837 = vpop.f32.mrf.mxu0
        %v838 = vadd.f32 0.0, %v837
        %839 = vdwg.mxu0
        %v841 = vsel %vm391, %v749, 0
        %843 = vmatpush.msra.mxu0 0.0
        %844 = vmatpush.msra.mxu0 0.0
        %845 = vmatpush.msra.mxu0 0.0
        %846 = vmatpush.msra.mxu0 0.0
        %847 = vmatpush.msra.mxu0 0.0
        %848 = vmatpush.msra.mxu0 0.0
        %849 = vmatpush.msra.mxu0 0.0
        %850 = vmatpush.msra.mxu0 0.0
        %851 = vmatpush.msra.mxu0 0.0
        %852 = vmatpush.msra.mxu0 0.0
        %853 = vmatpush.msra.mxu0 0.0
        %854 = vmatpush.msra.mxu0 0.0
        %855 = vmatpush.msra.mxu0 0.0
        %856 = vmatpush.msra.mxu0 0.0
        %857 = vmatpush.msra.mxu0 %v685
        %858 = vmatpush.msra.mxu0 %v684
        %859 = vmatmul.f32.gmra.mxu0 %v841
        %v860 = vpop.f32.mrf.mxu0
        %v861 = vadd.f32 %v838, %v860
        %862 = vdwg.mxu0
        %v863 = vadd.f32 %v861, %v600
        %v864 = vld [vmem:[#allocation8 + $0x122] sm:$0x1]
        %v865 = vld [vmem:[#allocation8 + $0x123] sm:$0x1]
        %v866 = vsel %vm360, %v863, 0.0
        %867 = vadd.xlane.f32.xlu0 %v866
        %v868 = vpop.xlane.xlu0 %867
        %v869 = vmul.f32 %v868, %v577
        %v870 = vsub.f32 %v863, %v869
        %v871 = vmul.f32 %v870, %v870
        %v872 = vsel %vm360, %v871, 0.0
        %873 = vadd.xlane.f32.xlu0 %v872
        %v874 = vpop.xlane.xlu0 %873
        %v875 = vmul.f32 %v874, %v577
        %v876 = vadd.f32 %v875, 1e-05
        %v877 = vrsqrt.pop %v876
        %v878 = vmul.f32 %v877, %v876
        %v879 = vmul.f32 %v878, %v877
        %v880 = vmul.f32 0.5, %v879
        %v881 = vsub.f32 1.5, %v880
        %v882 = vmul.f32 %v877, %v881
        %vm883 = vweird.f32 %v876
        %vm884 = vweird.f32 %v877
        %vm885 = vmor %vm883, %vm884
        %v886 = vsel %vm885, %v877, %v882
        %v887 = vmul.f32 %v870, %v886
        %v888 = vperm.slane %v864, 0
        %v889 = vmul.f32 %v887, %v888
        %v890 = vperm.slane %v865, 0
        %v891 = vadd.f32 %v889, %v890
        %v892 = vld [vmem:[#allocation8 + $0xc0] sm:$0xff]
        %v893 = vld [vmem:[#allocation8 + $0xc8] sm:$0xff]
        %v894 = vld [vmem:[#allocation8 + $0xd0] sm:$0xff]
        %v895 = vld [vmem:[#allocation8 + $0xd8] sm:$0xff]
        %v896 = vld [vmem:[#allocation8 + $0x126] sm:$0x1]
        %v897 = vperm.slane %v896, 0
        %v899 = vsel %vm360, %v891, 0
        %901 = vmatpush.msra.mxu0 0.0
        %902 = vmatpush.msra.mxu0 0.0
        %903 = vmatpush.msra.mxu0 0.0
        %904 = vmatpush.msra.mxu0 0.0
        %905 = vmatpush.msra.mxu0 0.0
        %906 = vmatpush.msra.mxu0 0.0
        %907 = vmatpush.msra.mxu0 0.0
        %908 = vmatpush.msra.mxu0 0.0
        %909 = vmatpush.msra.mxu0 0.0
        %910 = vmatpush.msra.mxu0 0.0
        %911 = vmatpush.msra.mxu0 0.0
        %912 = vmatpush.msra.mxu0 0.0
        %913 = vmatpush.msra.mxu0 %v895
        %914 = vmatpush.msra.mxu0 %v894
        %915 = vmatpush.msra.mxu0 %v893
        %916 = vmatpush.msra.mxu0 %v892
        %917 = vmatmul.f32.gmra.mxu0 %v899
        %v918 = vpop.f32.mrf.mxu0
        %v919 = vadd.f32 %v897, %v918
        %920 = vdwg.mxu0
        %v921 = vmax.f32 %v919, 0.0
        %v922 = vld [vmem:[#allocation8 + $0xe0] sm:$0xff]
        %v923 = vld [vmem:[#allocation8 + $0xe8] sm:$0xff]
        %v924 = vld [vmem:[#allocation8 + $0xf0] sm:$0xff]
        %v925 = vld [vmem:[#allocation8 + $0xf8] sm:$0xff]
        %v926 = vld [vmem:[#allocation8 + $0x100] sm:$0xff]
        %v927 = vld [vmem:[#allocation8 + $0x108] sm:$0xff]
        %v928 = vld [vmem:[#allocation8 + $0x110] sm:$0xff]
        %v929 = vld [vmem:[#allocation8 + $0x118] sm:$0xff]
        %v930 = vld [vmem:[#allocation8 + $0x127] sm:$0x1]
        %v931 = vperm.slane %v930, 0
        %vm932 = vcmask 523264
        %v934 = vsel %vm932, %v921, 0
        %936 = vmatpush.msra.mxu0 0.0
        %937 = vmatpush.msra.mxu0 0.0
        %938 = vmatpush.msra.mxu0 0.0
        %939 = vmatpush.msra.mxu0 0.0
        %940 = vmatpush.msra.mxu0 0.0
        %941 = vmatpush.msra.mxu0 0.0
        %942 = vmatpush.msra.mxu0 0.0
        %943 = vmatpush.msra.mxu0 0.0
        %944 = vmatpush.msra.mxu0 %v929
        %945 = vmatpush.msra.mxu0 %v928
        %946 = vmatpush.msra.mxu0 %v927
        %947 = vmatpush.msra.mxu0 %v926
        %948 = vmatpush.msra.mxu0 %v925
        %949 = vmatpush.msra.mxu0 %v924
        %950 = vmatpush.msra.mxu0 %v923
        %951 = vmatpush.msra.mxu0 %v922
        %952 = vmatmul.f32.gmra.mxu0 %v934
        %v953 = vpop.f32.mrf.mxu0
        %v954 = vadd.f32 %v931, %v953
        %955 = vdwg.mxu0
        %v956 = vadd.f32 %v954, %v891
        %v957 = vld [vmem:[#allocation8 + $0x124] sm:$0x1]
        %v958 = vld [vmem:[#allocation8 + $0x125] sm:$0x1]
        %v959 = vsel %vm360, %v956, 0.0
        %960 = vadd.xlane.f32.xlu0 %v959
        %v961 = vpop.xlane.xlu0 %960
        %v962 = vmul.f32 %v961, %v577
        %v963 = vsub.f32 %v956, %v962
        %v964 = vmul.f32 %v963, %v963
        %v965 = vsel %vm360, %v964, 0.0
        %966 = vadd.xlane.f32.xlu0 %v965
        %v967 = vpop.xlane.xlu0 %966
        %v968 = vmul.f32 %v967, %v577
        %v969 = vadd.f32 %v968, 1e-05
        %v970 = vrsqrt.pop %v969
        %v971 = vmul.f32 %v970, %v969
        %v972 = vmul.f32 %v971, %v970
        %v973 = vmul.f32 0.5, %v972
        %v974 = vsub.f32 1.5, %v973
        %v975 = vmul.f32 %v970, %v974
        %vm976 = vweird.f32 %v969
        %vm977 = vweird.f32 %v970
        %vm978 = vmor %vm976, %vm977
        %v979 = vsel %vm978, %v970, %v975
        %v980 = vmul.f32 %v963, %v979
        %v981 = vperm.slane %v957, 0
        %v982 = vmul.f32 %v980, %v981
        %v983 = vperm.slane %v958, 0
        %v984 = vadd.f32 %v982, %v983
        %985 = vst.msk [vmem:[%s344] sm:$0xff] %vm360, %v984
        %s986 = sand.u32 %s159, 1
        %s987 = scalar_lea.sflag [#allocation4], %s986
        %s988 = sand.u32 %s159, 1
        %s989 = smul.addr %s988, 8
        %s990 = scalar_lea.vmem [#allocation10], %s989
        // Predicated region
        $region57: #{tpu_custom_call.1} parent=39 // pred_check
          %p991 = pneg %p169
        $region58: #{tpu_custom_call.1} parent=39 // pred_check_branch
          %993 = sbr.rel (%p991) target = $region60
        $region59: #{tpu_custom_call.1} parent=39 // pred_region
          %995 = vsyncadd %s987, 0
          %s996 = smul.addr %s26, 8
          %s997 = scalar_lea.hbm %s5, %s996
          %s999 = sshll.u32 %s990, 4
          %s1000 = int_to_ptr.vmem [resolvable:$true] %s999
          %s1001 = sshll.u32 %s997, 4
          %s1002 = int_to_ptr.hbm [resolvable:$true] %s1001
          %1004 = dma.vmem_to_hbm [thread:$0]  %s1000, 128, %s1002, %s987
        $region60: #{tpu_custom_call.1} parent=39 // pred_fallthru
          _
      $region40: #{tpu_custom_call.1} parent=5 // pred_fallthru
        _
      %p1005 = scmp.le.s32.totalorder 2, %s21
      // Predicated region
      $region61: #{tpu_custom_call.1} parent=5 // pred_check
        %p1006 = pneg %p1005
      $region62: #{tpu_custom_call.1} parent=5 // pred_check_branch
        %1008 = sbr.rel (%p1006) target = $region64
      $region63: #{tpu_custom_call.1} parent=5 // pred_region
        %s1009 = ssub.s32 %s21, 2
        // Predicated region
        $region65: #{tpu_custom_call.1} parent=63 // pred_check
          %p1010 = pneg %p175
        $region66: #{tpu_custom_call.1} parent=63 // pred_check_branch
          %1012 = sbr.rel (%p1010) target = $region68
        $region67: #{tpu_custom_call.1} parent=63 // pred_region
          %s1013 = sand.u32 %s160, 1
          %s1014 = scalar_lea.sflag [#allocation4], %s1013
          %s1015 = sand.u32 %s160, 1
          %s1016 = smul.addr %s1015, 8
          %s1017 = scalar_lea.vmem [#allocation10], %s1016
          %1019 = dma.done %s1014, 128
        $region68: #{tpu_custom_call.1} parent=63 // pred_fallthru
          _
      $region64: #{tpu_custom_call.1} parent=5 // pred_fallthru
        _
    $region6: #{tpu_custom_call.1} parent=1 // loop_footer
      %s25 = sadd.s32 1, %s21
    $region7: #{tpu_custom_call.1} parent=1 // loop_footer_branch
      %20 = sbr.rel target = $region3
    $region8: #{tpu_custom_call.1} parent=1 // loop_exit
      _
    %1020 = vsyncpa [#allocation3], 1
    %s1021 = scalar_lea.sflag [#allocation3], 1
    %1022 = vsyncpa %s1021, 1
    %1023 = vsyncpa [#allocation6], 1
    %s1024 = scalar_lea.sflag [#allocation6], 1
    %1025 = vsyncpa %s1024, 1
    %1026 = vsyncpa [#allocation9], 1
    %1027 = vsyncpa [#allocation4], 1
    %s1028 = scalar_lea.sflag [#allocation4], 1
    %1029 = vsyncpa %s1028, 1

</llo_original>
